<compile_context>
chip_gen: v5e
topology: v5e:2x2
jax: 0.10.0
libtpu: 0.0.40
codegen_flags: <defaults>
</compile_context>

<pallas_src>
import jax
import jax.numpy as jnp
from jax.experimental import pallas as pl
from jax.experimental.pallas import tpu as pltpu

OUT_DIM = 10
C_IN = 3
C_STEM = 32
KH = KW = 3
K_RAW = KH * KW * C_IN          # 27
K_AUG = K_RAW + 1               # 28  (+1 ones column folds the conv bias)
K_PAD = 32                      # contraction dim padded for clean layout
HEAD_PAD = 128                  # lane-dense head / output width
N_TILE = 8                      # images per grid step (sublane-dense output)


def net_forward_kernel(p_ref, wc_ref, wh_ref, bh_ref, o_ref):
    """One batch-tile of N_TILE images per grid step.

    p_ref : (N_TILE, H*W, K_PAD)   bf16  im2col patches (+ ones col, zero-padded K)
    wc_ref: (K_PAD, C_STEM)        bf16  conv weight with bias row folded in
    wh_ref: (C_STEM, HEAD_PAD)     f32   head weight pre-scaled by 1/HW, 128-lane padded
    bh_ref: (1, HEAD_PAD)          f32   head bias, 128-lane padded
    o_ref : (N_TILE, HEAD_PAD)     f32   padded logits for this batch tile
    """
    nt, hw, kp = p_ref.shape

    # Fused im2col conv + bias for the whole tile: one MXU matmul, f32 acc.
    p = p_ref[...].reshape(nt * hw, kp)                       # layout no-op
    act = jnp.dot(p, wc_ref[...],
                  preferred_element_type=jnp.float32)         # (nt*HW, C_STEM) f32
    act = jnp.maximum(act, 0.0)                               # ReLU (VPU)

    # Global average pool: row-sum per image; the 1/HW scale is folded into wh.
    feat = jnp.sum(act.reshape(nt, hw, C_STEM), axis=1)       # (nt, C_STEM) f32

    # Batched classifier head on a lane-dense 128-wide padded slab.
    logits = jnp.dot(feat, wh_ref[...],
                     preferred_element_type=jnp.float32)      # (nt, HEAD_PAD)
    o_ref[...] = logits + bh_ref[...]                         # unmasked (8,128) store


def _im2col_patches(x_nchw, n_pad):
    """NCHW f32 -> (n_pad, H*W, K_PAD) bf16 im2col patches (+ ones column).

    Built directly in bf16 so the wrapper-side XLA fusion never writes an f32
    intermediate slab to HBM.
    """
    N, C, H, W = x_nchw.shape
    x = jnp.transpose(x_nchw, (0, 2, 3, 1)).astype(jnp.bfloat16)   # NHWC bf16
    xp = jnp.pad(x, ((0, 0), (1, 1), (1, 1), (0, 0)))              # 'same' padding
    cols = [xp[:, i:i + H, j:j + W, :] for i in range(KH) for j in range(KW)]
    patches = jnp.concatenate(cols, axis=-1).reshape(N, H * W, K_RAW)
    ones = jnp.ones((N, H * W, 1), jnp.bfloat16)
    patches = jnp.concatenate([patches, ones], axis=-1)            # (N, HW, 28)
    # Pad K to 32 and batch to a multiple of N_TILE (zero rows -> zero logits,
    # sliced off after the call).
    patches = jnp.pad(patches, ((0, n_pad - N), (0, 0), (0, K_PAD - K_AUG)))
    return patches


def _prep_params(wconv, bconv, whead, bhead, hw):
    # Conv weight (KH,KW,Cin,Cstem) -> (27, Cstem), bias folded as an extra row,
    # K padded to 32; cast to bf16 for the MXU.
    wc = wconv.reshape(K_RAW, C_STEM)
    wc = jnp.concatenate([wc, bconv.reshape(1, C_STEM)], axis=0)
    wc = jnp.pad(wc, ((0, K_PAD - K_AUG), (0, 0))).astype(jnp.bfloat16)
    # Head kept f32 (tiny); 1/HW average-pool scale folded in; lanes padded to
    # 128 for unmasked stores.  Padding lanes stay exactly zero so the trailing
    # [:OUT_DIM] slice is the only place the padded slab is consumed.
    wh = (whead * (1.0 / hw)).astype(jnp.float32)
    wh = jnp.pad(wh, ((0, 0), (0, HEAD_PAD - OUT_DIM)))
    bh = jnp.pad(bhead.astype(jnp.float32),
                 (0, HEAD_PAD - OUT_DIM)).reshape(1, HEAD_PAD)
    return wc, wh, bh


@jax.jit
def net_forward(x_nchw, wconv, bconv, whead, bhead):
    """x_nchw: (N, C_IN, H, W) float32 -> logits (N, OUT_DIM) float32."""
    N, C, H, W = x_nchw.shape
    assert C == C_IN
    HW = H * W
    n_pad = ((N + N_TILE - 1) // N_TILE) * N_TILE
    n_steps = n_pad // N_TILE

    patches = _im2col_patches(x_nchw, n_pad)
    wc, wh, bh = _prep_params(wconv, bconv, whead, bhead, HW)

    out = pl.pallas_call(
        net_forward_kernel,
        out_shape=jax.ShapeDtypeStruct((n_pad, HEAD_PAD), jnp.float32),
        grid=(n_steps,),
        in_specs=[
            pl.BlockSpec((N_TILE, HW, K_PAD), lambda i: (i, 0, 0)),   # patch tile
            pl.BlockSpec((K_PAD, C_STEM), lambda i: (0, 0)),          # conv weight
            pl.BlockSpec((C_STEM, HEAD_PAD), lambda i: (0, 0)),       # head weight
            pl.BlockSpec((1, HEAD_PAD), lambda i: (0, 0)),            # head bias
        ],
        out_specs=pl.BlockSpec((N_TILE, HEAD_PAD), lambda i: (i, 0)),
        compiler_params=pltpu.CompilerParams(
            dimension_semantics=("parallel",),
        ),
    )(patches, wc, wh, bh)

    return out[:N, :OUT_DIM]


def net_forward_reference(x_nchw, wconv, bconv, whead, bhead):
    """Pure-JAX f32 reference (same stand-in architecture)."""
    N, C, H, W = x_nchw.shape
    x = jnp.transpose(x_nchw, (0, 2, 3, 1))
    xp = jnp.pad(x, ((0, 0), (1, 1), (1, 1), (0, 0)))
    acc = jnp.zeros((N, H, W, C_STEM), jnp.float32)
    for i in range(KH):
        for j in range(KW):
            acc = acc + jnp.einsum("nhwc,cf->nhwf",
                                   xp[:, i:i + H, j:j + W, :], wconv[i, j])
    acc = jax.nn.relu(acc + bconv)
    feat = acc.reshape(N, H * W, C_STEM).mean(axis=1)
    return feat @ whead + bhead


def init_params(key):
    k1, k2, k3, k4 = jax.random.split(key, 4)
    wconv = jax.random.normal(k1, (KH, KW, C_IN, C_STEM), jnp.float32) * 0.1
    bconv = jax.random.normal(k2, (C_STEM,), jnp.float32) * 0.01
    whead = jax.random.normal(k3, (C_STEM, OUT_DIM), jnp.float32) * 0.1
    bhead = jax.random.normal(k4, (OUT_DIM,), jnp.float32) * 0.01
    return wconv, bconv, whead, bhead


if __name__ == "__main__":
    key = jax.random.PRNGKey(0)
    kx, kp = jax.random.split(key)

    # Small image batch consistent with an image classifier: NCHW [2, 3, 16, 16].
    x = jax.random.normal(kx, (2, C_IN, 16, 16), jnp.float32)
    wconv, bconv, whead, bhead = init_params(kp)

    logits = net_forward(x, wconv, bconv, whead, bhead)
    jax.block_until_ready(logits)
    assert logits.shape == (2, OUT_DIM)

    # Check vs. f32 reference (kernel uses bf16 patches/conv weight -> ~1e-2 err).
    ref = net_forward_reference(x, wconv, bconv, whead, bhead)
    assert float(jnp.max(jnp.abs(logits - ref))) < 0.1

    print("KERNEL_OK")
</pallas_src>

<mosaic_0001>
module attributes {stable_mosaic.version = 11 : i64} {
  func.func @net_forward_kernel(%arg0: i32, %arg1: memref<8x256x32xbf16, #tpu.memory_space<vmem>>, %arg2: memref<32x32xbf16, #tpu.memory_space<vmem>>, %arg3: memref<32x128xf32, #tpu.memory_space<vmem>>, %arg4: memref<1x128xf32, #tpu.memory_space<vmem>>, %arg5: memref<8x128xf32, #tpu.memory_space<vmem>>) attributes {dimension_semantics = [#tpu.dimension_semantics<parallel>], iteration_bounds = array<i64: 1>, scalar_prefetch = 0 : i64, scratch_operands = 0 : i64, tpu.core_type = #tpu.core_type<tc>, window_params = [{transform_indices = @transform_0, window_bounds = array<i64: 8, 256, 32>}, {pipeline_mode = #tpu.pipeline_mode<synchronous>, transform_indices = @transform_1, window_bounds = array<i64: 32, 32>}, {pipeline_mode = #tpu.pipeline_mode<synchronous>, transform_indices = @transform_2, window_bounds = array<i64: 32, 128>}, {pipeline_mode = #tpu.pipeline_mode<synchronous>, transform_indices = @transform_3, window_bounds = array<i64: 1, 128>}, {transform_indices = @transform_4, window_bounds = array<i64: 8, 128>}]} {
    %c0 = arith.constant 0 : index
    %c0_0 = arith.constant 0 : index
    %c0_1 = arith.constant 0 : index
    %0 = vector.load %arg1[%c0, %c0_0, %c0_1] : memref<8x256x32xbf16, #tpu.memory_space<vmem>>, vector<8x256x32xbf16>
    %1 = vector.shape_cast %0 : vector<8x256x32xbf16> to vector<2048x32xbf16>
    %c0_2 = arith.constant 0 : index
    %c0_3 = arith.constant 0 : index
    %2 = vector.load %arg2[%c0_2, %c0_3] : memref<32x32xbf16, #tpu.memory_space<vmem>>, vector<32x32xbf16>
    %cst = arith.constant dense<0.000000e+00> : vector<2048x32xf32>
    %3 = tpu.matmul %1, %2, %cst {dimension_numbers = #tpu.dot_dimension_numbers<[1], [0], [0], [1], [0, 0, 1, 1], [], []>} : vector<2048x32xbf16>, vector<32x32xbf16>, vector<2048x32xf32> -> vector<2048x32xf32>
    %cst_4 = arith.constant 0.000000e+00 : f32
    %4 = vector.broadcast %cst_4 : f32 to vector<2048x32xf32>
    %5 = arith.maximumf %3, %4 : vector<2048x32xf32>
    %6 = vector.shape_cast %5 : vector<2048x32xf32> to vector<8x256x32xf32>
    %cst_5 = arith.constant dense<0.000000e+00> : vector<8x32xf32>
    %7 = vector.multi_reduction <add>, %6, %cst_5 [1] : vector<8x256x32xf32> to vector<8x32xf32>
    %c0_6 = arith.constant 0 : index
    %c0_7 = arith.constant 0 : index
    %8 = vector.load %arg3[%c0_6, %c0_7] : memref<32x128xf32, #tpu.memory_space<vmem>>, vector<32x128xf32>
    %cst_8 = arith.constant dense<0.000000e+00> : vector<8x128xf32>
    %9 = tpu.matmul %7, %8, %cst_8 {dimension_numbers = #tpu.dot_dimension_numbers<[1], [0], [0], [1], [0, 0, 1, 1], [], []>} : vector<8x32xf32>, vector<32x128xf32>, vector<8x128xf32> -> vector<8x128xf32>
    %c0_9 = arith.constant 0 : index
    %c0_10 = arith.constant 0 : index
    %10 = vector.load %arg4[%c0_9, %c0_10] : memref<1x128xf32, #tpu.memory_space<vmem>>, vector<1x128xf32>
    %11 = vector.broadcast %10 : vector<1x128xf32> to vector<8x128xf32>
    %12 = arith.addf %9, %11 : vector<8x128xf32>
    %c0_11 = arith.constant 0 : index
    %c0_12 = arith.constant 0 : index
    %13 = vector.load %arg5[%c0_11, %c0_12] : memref<8x128xf32, #tpu.memory_space<vmem>>, vector<8x128xf32>
    tpu.vector_store %arg5[%c0_11, %c0_12], %12 {strides = array<i32>} : memref<8x128xf32, #tpu.memory_space<vmem>>, vector<8x128xf32>,
    return
  }
  func.func @transform_0(%arg0: i32) -> (i32, i32, i32) {
    %c0_i32 = arith.constant 0 : i32
    %c0_i32_0 = arith.constant 0 : i32
    %c0_i32_1 = arith.constant 0 : i32
    return %arg0, %c0_i32, %c0_i32_0 : i32, i32, i32
  }
  func.func @transform_1(%arg0: i32) -> (i32, i32) {
    %c0_i32 = arith.constant 0 : i32
    %c0_i32_0 = arith.constant 0 : i32
    %c0_i32_1 = arith.constant 0 : i32
    return %c0_i32, %c0_i32_0 : i32, i32
  }
  func.func @transform_2(%arg0: i32) -> (i32, i32) {
    %c0_i32 = arith.constant 0 : i32
    %c0_i32_0 = arith.constant 0 : i32
    %c0_i32_1 = arith.constant 0 : i32
    return %c0_i32, %c0_i32_0 : i32, i32
  }
  func.func @transform_3(%arg0: i32) -> (i32, i32) {
    %c0_i32 = arith.constant 0 : i32
    %c0_i32_0 = arith.constant 0 : i32
    %c0_i32_1 = arith.constant 0 : i32
    return %c0_i32, %c0_i32_0 : i32, i32
  }
  func.func @transform_4(%arg0: i32) -> (i32, i32) {
    %c0_i32 = arith.constant 0 : i32
    %c0_i32_0 = arith.constant 0 : i32
    return %arg0, %c0_i32 : i32, i32
  }
}

</mosaic_0001>

<llo_original>
// kernel: net_forward.1
$region0: #{net_forward.1}
  #allocation0 [shape = 'u32[]', space=smem, size = 0x4, offset = 0x4, fixed_abs, tag = 'smem constant byte address 0x4 - core index']
  #allocation1 [shape = 'u32[72,128]{1,0:T(1,128)}', space=vmem, size = 0x9000, scoped, tag = 'internal scratch']
  %s0 = inlined_call_operand.vmem [shape: bf16[8,256,32], index: 0, kind: input, shape index: {}]
  %s1 = inlined_call_operand.vmem [shape: bf16[32,32], index: 1, kind: input, shape index: {}]
  %s2 = inlined_call_operand.vmem [shape: f32[32,128], index: 2, kind: input, shape index: {}]
  %s3 = inlined_call_operand.vmem [shape: f32[1,128], index: 3, kind: input, shape index: {}]
  %s4 = inlined_call_operand.vmem [shape: f32[8,128], index: 4, kind: output, shape index: {}]
  %s5 = sld [smem:[#allocation0]]
  $region26: #{net_forward.1} parent=0
    _
  %s7 = ssub.s32 1, %s5
  %s8 = scalar_select 0, %s7, %s5
  // Predicated region
  $region2: #{net_forward.1} parent=0 // pred_check
    _
  $region3: #{net_forward.1} parent=0 // pred_check_branch
    %10 = sbr.rel (0) target = $region5
  $region4: #{net_forward.1} parent=0 // pred_region
    _
  $region5: #{net_forward.1} parent=0 // pred_fallthru
    _
  // Predicated region
  $region6: #{net_forward.1} parent=0 // pred_check
    _
  $region7: #{net_forward.1} parent=0 // pred_check_branch
    %12 = sbr.rel (0) target = $region9
  $region8: #{net_forward.1} parent=0 // pred_region
    _
  $region9: #{net_forward.1} parent=0 // pred_fallthru
    _
  // Predicated region
  $region10: #{net_forward.1} parent=0 // pred_check
    _
  $region11: #{net_forward.1} parent=0 // pred_check_branch
    %14 = sbr.rel (0) target = $region13
  $region12: #{net_forward.1} parent=0 // pred_region
    _
  $region13: #{net_forward.1} parent=0 // pred_fallthru
    _
  // Predicated region
  $region14: #{net_forward.1} parent=0 // pred_check
    _
  $region15: #{net_forward.1} parent=0 // pred_check_branch
    %16 = sbr.rel (0) target = $region17
  $region16: #{net_forward.1} parent=0 // pred_region
    _
  $region17: #{net_forward.1} parent=0 // pred_fallthru
    _
  %v18 = vld [vmem:[%s0] sm:$0xf]
  %v19 = vld [vmem:[%s0 + $0x4] sm:$0xf]
  %v20 = vld [vmem:[%s0 + $0x8] sm:$0xf]
  %v21 = vld [vmem:[%s0 + $0xc] sm:$0xf]
  %v22 = vld [vmem:[%s0 + $0x10] sm:$0xf]
  %v23 = vld [vmem:[%s0 + $0x14] sm:$0xf]
  %v24 = vld [vmem:[%s0 + $0x18] sm:$0xf]
  %v25 = vld [vmem:[%s0 + $0x1c] sm:$0xf]
  %v26 = vld [vmem:[%s0 + $0x20] sm:$0xf]
  %v27 = vld [vmem:[%s0 + $0x24] sm:$0xf]
  %v28 = vld [vmem:[%s0 + $0x28] sm:$0xf]
  %v29 = vld [vmem:[%s0 + $0x2c] sm:$0xf]
  %v30 = vld [vmem:[%s0 + $0x30] sm:$0xf]
  %v31 = vld [vmem:[%s0 + $0x34] sm:$0xf]
  %v32 = vld [vmem:[%s0 + $0x38] sm:$0xf]
  %v33 = vld [vmem:[%s0 + $0x3c] sm:$0xf]
  %v34 = vld [vmem:[%s0 + $0x40] sm:$0xf]
  %v35 = vld [vmem:[%s0 + $0x44] sm:$0xf]
  %v36 = vld [vmem:[%s0 + $0x48] sm:$0xf]
  %v37 = vld [vmem:[%s0 + $0x4c] sm:$0xf]
  %v38 = vld [vmem:[%s0 + $0x50] sm:$0xf]
  %v39 = vld [vmem:[%s0 + $0x54] sm:$0xf]
  %v40 = vld [vmem:[%s0 + $0x58] sm:$0xf]
  %v41 = vld [vmem:[%s0 + $0x5c] sm:$0xf]
  %v42 = vld [vmem:[%s0 + $0x60] sm:$0xf]
  %v43 = vld [vmem:[%s0 + $0x64] sm:$0xf]
  %v44 = vld [vmem:[%s0 + $0x68] sm:$0xf]
  %v45 = vld [vmem:[%s0 + $0x6c] sm:$0xf]
  %v46 = vld [vmem:[%s0 + $0x70] sm:$0xf]
  %v47 = vld [vmem:[%s0 + $0x74] sm:$0xf]
  %v48 = vld [vmem:[%s0 + $0x78] sm:$0xf]
  %v49 = vld [vmem:[%s0 + $0x7c] sm:$0xf]
  %v50 = vld [vmem:[%s0 + $0x80] sm:$0xf]
  %v51 = vld [vmem:[%s0 + $0x84] sm:$0xf]
  %v52 = vld [vmem:[%s0 + $0x88] sm:$0xf]
  %v53 = vld [vmem:[%s0 + $0x8c] sm:$0xf]
  %v54 = vld [vmem:[%s0 + $0x90] sm:$0xf]
  %v55 = vld [vmem:[%s0 + $0x94] sm:$0xf]
  %v56 = vld [vmem:[%s0 + $0x98] sm:$0xf]
  %v57 = vld [vmem:[%s0 + $0x9c] sm:$0xf]
  %v58 = vld [vmem:[%s0 + $0xa0] sm:$0xf]
  %v59 = vld [vmem:[%s0 + $0xa4] sm:$0xf]
  %v60 = vld [vmem:[%s0 + $0xa8] sm:$0xf]
  %v61 = vld [vmem:[%s0 + $0xac] sm:$0xf]
  %v62 = vld [vmem:[%s0 + $0xb0] sm:$0xf]
  %v63 = vld [vmem:[%s0 + $0xb4] sm:$0xf]
  %v64 = vld [vmem:[%s0 + $0xb8] sm:$0xf]
  %v65 = vld [vmem:[%s0 + $0xbc] sm:$0xf]
  %v66 = vld [vmem:[%s0 + $0xc0] sm:$0xf]
  %v67 = vld [vmem:[%s0 + $0xc4] sm:$0xf]
  %v68 = vld [vmem:[%s0 + $0xc8] sm:$0xf]
  %v69 = vld [vmem:[%s0 + $0xcc] sm:$0xf]
  %v70 = vld [vmem:[%s0 + $0xd0] sm:$0xf]
  %v71 = vld [vmem:[%s0 + $0xd4] sm:$0xf]
  %v72 = vld [vmem:[%s0 + $0xd8] sm:$0xf]
  %v73 = vld [vmem:[%s0 + $0xdc] sm:$0xf]
  %v74 = vld [vmem:[%s0 + $0xe0] sm:$0xf]
  %v75 = vld [vmem:[%s0 + $0xe4] sm:$0xf]
  %v76 = vld [vmem:[%s0 + $0xe8] sm:$0xf]
  %v77 = vld [vmem:[%s0 + $0xec] sm:$0xf]
  %v78 = vld [vmem:[%s0 + $0xf0] sm:$0xf]
  %v79 = vld [vmem:[%s0 + $0xf4] sm:$0xf]
  %v80 = vld [vmem:[%s0 + $0xf8] sm:$0xf]
  %v81 = vld [vmem:[%s0 + $0xfc] sm:$0xf]
  %v82 = vld [vmem:[%s0 + $0x100] sm:$0xf]
  %v83 = vld [vmem:[%s0 + $0x104] sm:$0xf]
  %v84 = vld [vmem:[%s0 + $0x108] sm:$0xf]
  %v85 = vld [vmem:[%s0 + $0x10c] sm:$0xf]
  %v86 = vld [vmem:[%s0 + $0x110] sm:$0xf]
  %v87 = vld [vmem:[%s0 + $0x114] sm:$0xf]
  %v88 = vld [vmem:[%s0 + $0x118] sm:$0xf]
  %v89 = vld [vmem:[%s0 + $0x11c] sm:$0xf]
  %v90 = vld [vmem:[%s0 + $0x120] sm:$0xf]
  %v91 = vld [vmem:[%s0 + $0x124] sm:$0xf]
  %v92 = vld [vmem:[%s0 + $0x128] sm:$0xf]
  %v93 = vld [vmem:[%s0 + $0x12c] sm:$0xf]
  %v94 = vld [vmem:[%s0 + $0x130] sm:$0xf]
  %v95 = vld [vmem:[%s0 + $0x134] sm:$0xf]
  %v96 = vld [vmem:[%s0 + $0x138] sm:$0xf]
  %v97 = vld [vmem:[%s0 + $0x13c] sm:$0xf]
  %v98 = vld [vmem:[%s0 + $0x140] sm:$0xf]
  %v99 = vld [vmem:[%s0 + $0x144] sm:$0xf]
  %v100 = vld [vmem:[%s0 + $0x148] sm:$0xf]
  %v101 = vld [vmem:[%s0 + $0x14c] sm:$0xf]
  %v102 = vld [vmem:[%s0 + $0x150] sm:$0xf]
  %v103 = vld [vmem:[%s0 + $0x154] sm:$0xf]
  %v104 = vld [vmem:[%s0 + $0x158] sm:$0xf]
  %v105 = vld [vmem:[%s0 + $0x15c] sm:$0xf]
  %v106 = vld [vmem:[%s0 + $0x160] sm:$0xf]
  %v107 = vld [vmem:[%s0 + $0x164] sm:$0xf]
  %v108 = vld [vmem:[%s0 + $0x168] sm:$0xf]
  %v109 = vld [vmem:[%s0 + $0x16c] sm:$0xf]
  %v110 = vld [vmem:[%s0 + $0x170] sm:$0xf]
  %v111 = vld [vmem:[%s0 + $0x174] sm:$0xf]
  %v112 = vld [vmem:[%s0 + $0x178] sm:$0xf]
  %v113 = vld [vmem:[%s0 + $0x17c] sm:$0xf]
  %v114 = vld [vmem:[%s0 + $0x180] sm:$0xf]
  %v115 = vld [vmem:[%s0 + $0x184] sm:$0xf]
  %v116 = vld [vmem:[%s0 + $0x188] sm:$0xf]
  %v117 = vld [vmem:[%s0 + $0x18c] sm:$0xf]
  %v118 = vld [vmem:[%s0 + $0x190] sm:$0xf]
  %v119 = vld [vmem:[%s0 + $0x194] sm:$0xf]
  %v120 = vld [vmem:[%s0 + $0x198] sm:$0xf]
  %v121 = vld [vmem:[%s0 + $0x19c] sm:$0xf]
  %v122 = vld [vmem:[%s0 + $0x1a0] sm:$0xf]
  %v123 = vld [vmem:[%s0 + $0x1a4] sm:$0xf]
  %v124 = vld [vmem:[%s0 + $0x1a8] sm:$0xf]
  %v125 = vld [vmem:[%s0 + $0x1ac] sm:$0xf]
  %v126 = vld [vmem:[%s0 + $0x1b0] sm:$0xf]
  %v127 = vld [vmem:[%s0 + $0x1b4] sm:$0xf]
  %v128 = vld [vmem:[%s0 + $0x1b8] sm:$0xf]
  %v129 = vld [vmem:[%s0 + $0x1bc] sm:$0xf]
  %v130 = vld [vmem:[%s0 + $0x1c0] sm:$0xf]
  %v131 = vld [vmem:[%s0 + $0x1c4] sm:$0xf]
  %v132 = vld [vmem:[%s0 + $0x1c8] sm:$0xf]
  %v133 = vld [vmem:[%s0 + $0x1cc] sm:$0xf]
  %v134 = vld [vmem:[%s0 + $0x1d0] sm:$0xf]
  %v135 = vld [vmem:[%s0 + $0x1d4] sm:$0xf]
  %v136 = vld [vmem:[%s0 + $0x1d8] sm:$0xf]
  %v137 = vld [vmem:[%s0 + $0x1dc] sm:$0xf]
  %v138 = vld [vmem:[%s0 + $0x1e0] sm:$0xf]
  %v139 = vld [vmem:[%s0 + $0x1e4] sm:$0xf]
  %v140 = vld [vmem:[%s0 + $0x1e8] sm:$0xf]
  %v141 = vld [vmem:[%s0 + $0x1ec] sm:$0xf]
  %v142 = vld [vmem:[%s0 + $0x1f0] sm:$0xf]
  %v143 = vld [vmem:[%s0 + $0x1f4] sm:$0xf]
  %v144 = vld [vmem:[%s0 + $0x1f8] sm:$0xf]
  %v145 = vld [vmem:[%s0 + $0x1fc] sm:$0xf]
  %v146 = vld [vmem:[%s0 + $0x200] sm:$0xf]
  %v147 = vld [vmem:[%s0 + $0x204] sm:$0xf]
  %v148 = vld [vmem:[%s0 + $0x208] sm:$0xf]
  %v149 = vld [vmem:[%s0 + $0x20c] sm:$0xf]
  %v150 = vld [vmem:[%s0 + $0x210] sm:$0xf]
  %v151 = vld [vmem:[%s0 + $0x214] sm:$0xf]
  %v152 = vld [vmem:[%s0 + $0x218] sm:$0xf]
  %v153 = vld [vmem:[%s0 + $0x21c] sm:$0xf]
  %v154 = vld [vmem:[%s0 + $0x220] sm:$0xf]
  %v155 = vld [vmem:[%s0 + $0x224] sm:$0xf]
  %v156 = vld [vmem:[%s0 + $0x228] sm:$0xf]
  %v157 = vld [vmem:[%s0 + $0x22c] sm:$0xf]
  %v158 = vld [vmem:[%s0 + $0x230] sm:$0xf]
  %v159 = vld [vmem:[%s0 + $0x234] sm:$0xf]
  %v160 = vld [vmem:[%s0 + $0x238] sm:$0xf]
  %v161 = vld [vmem:[%s0 + $0x23c] sm:$0xf]
  %v162 = vld [vmem:[%s0 + $0x240] sm:$0xf]
  %v163 = vld [vmem:[%s0 + $0x244] sm:$0xf]
  %v164 = vld [vmem:[%s0 + $0x248] sm:$0xf]
  %v165 = vld [vmem:[%s0 + $0x24c] sm:$0xf]
  %v166 = vld [vmem:[%s0 + $0x250] sm:$0xf]
  %v167 = vld [vmem:[%s0 + $0x254] sm:$0xf]
  %v168 = vld [vmem:[%s0 + $0x258] sm:$0xf]
  %v169 = vld [vmem:[%s0 + $0x25c] sm:$0xf]
  %v170 = vld [vmem:[%s0 + $0x260] sm:$0xf]
  %v171 = vld [vmem:[%s0 + $0x264] sm:$0xf]
  %v172 = vld [vmem:[%s0 + $0x268] sm:$0xf]
  %v173 = vld [vmem:[%s0 + $0x26c] sm:$0xf]
  %v174 = vld [vmem:[%s0 + $0x270] sm:$0xf]
  %v175 = vld [vmem:[%s0 + $0x274] sm:$0xf]
  %v176 = vld [vmem:[%s0 + $0x278] sm:$0xf]
  %v177 = vld [vmem:[%s0 + $0x27c] sm:$0xf]
  %v178 = vld [vmem:[%s0 + $0x280] sm:$0xf]
  %v179 = vld [vmem:[%s0 + $0x284] sm:$0xf]
  %v180 = vld [vmem:[%s0 + $0x288] sm:$0xf]
  %v181 = vld [vmem:[%s0 + $0x28c] sm:$0xf]
  %v182 = vld [vmem:[%s0 + $0x290] sm:$0xf]
  %v183 = vld [vmem:[%s0 + $0x294] sm:$0xf]
  %v184 = vld [vmem:[%s0 + $0x298] sm:$0xf]
  %v185 = vld [vmem:[%s0 + $0x29c] sm:$0xf]
  %v186 = vld [vmem:[%s0 + $0x2a0] sm:$0xf]
  %v187 = vld [vmem:[%s0 + $0x2a4] sm:$0xf]
  %v188 = vld [vmem:[%s0 + $0x2a8] sm:$0xf]
  %v189 = vld [vmem:[%s0 + $0x2ac] sm:$0xf]
  %v190 = vld [vmem:[%s0 + $0x2b0] sm:$0xf]
  %v191 = vld [vmem:[%s0 + $0x2b4] sm:$0xf]
  %v192 = vld [vmem:[%s0 + $0x2b8] sm:$0xf]
  %v193 = vld [vmem:[%s0 + $0x2bc] sm:$0xf]
  %v194 = vld [vmem:[%s0 + $0x2c0] sm:$0xf]
  %v195 = vld [vmem:[%s0 + $0x2c4] sm:$0xf]
  %v196 = vld [vmem:[%s0 + $0x2c8] sm:$0xf]
  %v197 = vld [vmem:[%s0 + $0x2cc] sm:$0xf]
  %v198 = vld [vmem:[%s0 + $0x2d0] sm:$0xf]
  %v199 = vld [vmem:[%s0 + $0x2d4] sm:$0xf]
  %v200 = vld [vmem:[%s0 + $0x2d8] sm:$0xf]
  %v201 = vld [vmem:[%s0 + $0x2dc] sm:$0xf]
  %v202 = vld [vmem:[%s0 + $0x2e0] sm:$0xf]
  %v203 = vld [vmem:[%s0 + $0x2e4] sm:$0xf]
  %v204 = vld [vmem:[%s0 + $0x2e8] sm:$0xf]
  %v205 = vld [vmem:[%s0 + $0x2ec] sm:$0xf]
  %v206 = vld [vmem:[%s0 + $0x2f0] sm:$0xf]
  %v207 = vld [vmem:[%s0 + $0x2f4] sm:$0xf]
  %v208 = vld [vmem:[%s0 + $0x2f8] sm:$0xf]
  %v209 = vld [vmem:[%s0 + $0x2fc] sm:$0xf]
  %v210 = vld [vmem:[%s0 + $0x300] sm:$0xf]
  %v211 = vld [vmem:[%s0 + $0x304] sm:$0xf]
  %v212 = vld [vmem:[%s0 + $0x308] sm:$0xf]
  %v213 = vld [vmem:[%s0 + $0x30c] sm:$0xf]
  %v214 = vld [vmem:[%s0 + $0x310] sm:$0xf]
  %v215 = vld [vmem:[%s0 + $0x314] sm:$0xf]
  %v216 = vld [vmem:[%s0 + $0x318] sm:$0xf]
  %v217 = vld [vmem:[%s0 + $0x31c] sm:$0xf]
  %v218 = vld [vmem:[%s0 + $0x320] sm:$0xf]
  %v219 = vld [vmem:[%s0 + $0x324] sm:$0xf]
  %v220 = vld [vmem:[%s0 + $0x328] sm:$0xf]
  %v221 = vld [vmem:[%s0 + $0x32c] sm:$0xf]
  %v222 = vld [vmem:[%s0 + $0x330] sm:$0xf]
  %v223 = vld [vmem:[%s0 + $0x334] sm:$0xf]
  %v224 = vld [vmem:[%s0 + $0x338] sm:$0xf]
  %v225 = vld [vmem:[%s0 + $0x33c] sm:$0xf]
  %v226 = vld [vmem:[%s0 + $0x340] sm:$0xf]
  %v227 = vld [vmem:[%s0 + $0x344] sm:$0xf]
  %v228 = vld [vmem:[%s0 + $0x348] sm:$0xf]
  %v229 = vld [vmem:[%s0 + $0x34c] sm:$0xf]
  %v230 = vld [vmem:[%s0 + $0x350] sm:$0xf]
  %v231 = vld [vmem:[%s0 + $0x354] sm:$0xf]
  %v232 = vld [vmem:[%s0 + $0x358] sm:$0xf]
  %v233 = vld [vmem:[%s0 + $0x35c] sm:$0xf]
  %v234 = vld [vmem:[%s0 + $0x360] sm:$0xf]
  %v235 = vld [vmem:[%s0 + $0x364] sm:$0xf]
  %v236 = vld [vmem:[%s0 + $0x368] sm:$0xf]
  %v237 = vld [vmem:[%s0 + $0x36c] sm:$0xf]
  %v238 = vld [vmem:[%s0 + $0x370] sm:$0xf]
  %v239 = vld [vmem:[%s0 + $0x374] sm:$0xf]
  %v240 = vld [vmem:[%s0 + $0x378] sm:$0xf]
  %v241 = vld [vmem:[%s0 + $0x37c] sm:$0xf]
  %v242 = vld [vmem:[%s0 + $0x380] sm:$0xf]
  %v243 = vld [vmem:[%s0 + $0x384] sm:$0xf]
  %v244 = vld [vmem:[%s0 + $0x388] sm:$0xf]
  %v245 = vld [vmem:[%s0 + $0x38c] sm:$0xf]
  %v246 = vld [vmem:[%s0 + $0x390] sm:$0xf]
  %v247 = vld [vmem:[%s0 + $0x394] sm:$0xf]
  %v248 = vld [vmem:[%s0 + $0x398] sm:$0xf]
  %v249 = vld [vmem:[%s0 + $0x39c] sm:$0xf]
  %v250 = vld [vmem:[%s0 + $0x3a0] sm:$0xf]
  %v251 = vld [vmem:[%s0 + $0x3a4] sm:$0xf]
  %v252 = vld [vmem:[%s0 + $0x3a8] sm:$0xf]
  %v253 = vld [vmem:[%s0 + $0x3ac] sm:$0xf]
  %v254 = vld [vmem:[%s0 + $0x3b0] sm:$0xf]
  %v255 = vld [vmem:[%s0 + $0x3b4] sm:$0xf]
  %v256 = vld [vmem:[%s0 + $0x3b8] sm:$0xf]
  %v257 = vld [vmem:[%s0 + $0x3bc] sm:$0xf]
  %v258 = vld [vmem:[%s0 + $0x3c0] sm:$0xf]
  %v259 = vld [vmem:[%s0 + $0x3c4] sm:$0xf]
  %v260 = vld [vmem:[%s0 + $0x3c8] sm:$0xf]
  %v261 = vld [vmem:[%s0 + $0x3cc] sm:$0xf]
  %v262 = vld [vmem:[%s0 + $0x3d0] sm:$0xf]
  %v263 = vld [vmem:[%s0 + $0x3d4] sm:$0xf]
  %v264 = vld [vmem:[%s0 + $0x3d8] sm:$0xf]
  %v265 = vld [vmem:[%s0 + $0x3dc] sm:$0xf]
  %v266 = vld [vmem:[%s0 + $0x3e0] sm:$0xf]
  %v267 = vld [vmem:[%s0 + $0x3e4] sm:$0xf]
  %v268 = vld [vmem:[%s0 + $0x3e8] sm:$0xf]
  %v269 = vld [vmem:[%s0 + $0x3ec] sm:$0xf]
  %v270 = vld [vmem:[%s0 + $0x3f0] sm:$0xf]
  %v271 = vld [vmem:[%s0 + $0x3f4] sm:$0xf]
  %v272 = vld [vmem:[%s0 + $0x3f8] sm:$0xf]
  %v273 = vld [vmem:[%s0 + $0x3fc] sm:$0xf]
  %v274 = vld [vmem:[%s1] sm:$0xf]
  %v275 = vld [vmem:[%s1 + $0x4] sm:$0xf]
  %v276 = vld [vmem:[%s1 + $0x8] sm:$0xf]
  %v277 = vld [vmem:[%s1 + $0xc] sm:$0xf]
  %v534 = vunpack.c.l.b16 %v18
  %v535 = vunpack.c.l.b16 %v19
  %v536 = vunpack.c.l.b16 %v20
  %v537 = vunpack.c.l.b16 %v21
  %v538 = vunpack.c.l.b16 %v22
  %v539 = vunpack.c.l.b16 %v23
  %v540 = vunpack.c.l.b16 %v24
  %v541 = vunpack.c.l.b16 %v25
  %v542 = vunpack.c.l.b16 %v26
  %v543 = vunpack.c.l.b16 %v27
  %v544 = vunpack.c.l.b16 %v28
  %v545 = vunpack.c.l.b16 %v29
  %v546 = vunpack.c.l.b16 %v30
  %v547 = vunpack.c.l.b16 %v31
  %v548 = vunpack.c.l.b16 %v32
  %v549 = vunpack.c.l.b16 %v33
  %v550 = vunpack.c.l.b16 %v34
  %v551 = vunpack.c.l.b16 %v35
  %v552 = vunpack.c.l.b16 %v36
  %v553 = vunpack.c.l.b16 %v37
  %v554 = vunpack.c.l.b16 %v38
  %v555 = vunpack.c.l.b16 %v39
  %v556 = vunpack.c.l.b16 %v40
  %v557 = vunpack.c.l.b16 %v41
  %v558 = vunpack.c.l.b16 %v42
  %v559 = vunpack.c.l.b16 %v43
  %v560 = vunpack.c.l.b16 %v44
  %v561 = vunpack.c.l.b16 %v45
  %v562 = vunpack.c.l.b16 %v46
  %v563 = vunpack.c.l.b16 %v47
  %v564 = vunpack.c.l.b16 %v48
  %v565 = vunpack.c.l.b16 %v49
  %v566 = vunpack.c.l.b16 %v50
  %v567 = vunpack.c.l.b16 %v51
  %v568 = vunpack.c.l.b16 %v52
  %v569 = vunpack.c.l.b16 %v53
  %v570 = vunpack.c.l.b16 %v54
  %v571 = vunpack.c.l.b16 %v55
  %v572 = vunpack.c.l.b16 %v56
  %v573 = vunpack.c.l.b16 %v57
  %v574 = vunpack.c.l.b16 %v58
  %v575 = vunpack.c.l.b16 %v59
  %v576 = vunpack.c.l.b16 %v60
  %v577 = vunpack.c.l.b16 %v61
  %v578 = vunpack.c.l.b16 %v62
  %v579 = vunpack.c.l.b16 %v63
  %v580 = vunpack.c.l.b16 %v64
  %v581 = vunpack.c.l.b16 %v65
  %v582 = vunpack.c.l.b16 %v66
  %v583 = vunpack.c.l.b16 %v67
  %v584 = vunpack.c.l.b16 %v68
  %v585 = vunpack.c.l.b16 %v69
  %v586 = vunpack.c.l.b16 %v70
  %v587 = vunpack.c.l.b16 %v71
  %v588 = vunpack.c.l.b16 %v72
  %v589 = vunpack.c.l.b16 %v73
  %v590 = vunpack.c.l.b16 %v74
  %v591 = vunpack.c.l.b16 %v75
  %v592 = vunpack.c.l.b16 %v76
  %v593 = vunpack.c.l.b16 %v77
  %v594 = vunpack.c.l.b16 %v78
  %v595 = vunpack.c.l.b16 %v79
  %v596 = vunpack.c.l.b16 %v80
  %v597 = vunpack.c.l.b16 %v81
  %v598 = vunpack.c.l.b16 %v82
  %v599 = vunpack.c.l.b16 %v83
  %v600 = vunpack.c.l.b16 %v84
  %v601 = vunpack.c.l.b16 %v85
  %v602 = vunpack.c.l.b16 %v86
  %v603 = vunpack.c.l.b16 %v87
  %v604 = vunpack.c.l.b16 %v88
  %v605 = vunpack.c.l.b16 %v89
  %v606 = vunpack.c.l.b16 %v90
  %v607 = vunpack.c.l.b16 %v91
  %v608 = vunpack.c.l.b16 %v92
  %v609 = vunpack.c.l.b16 %v93
  %v610 = vunpack.c.l.b16 %v94
  %v611 = vunpack.c.l.b16 %v95
  %v612 = vunpack.c.l.b16 %v96
  %v613 = vunpack.c.l.b16 %v97
  %v614 = vunpack.c.l.b16 %v98
  %v615 = vunpack.c.l.b16 %v99
  %v616 = vunpack.c.l.b16 %v100
  %v617 = vunpack.c.l.b16 %v101
  %v618 = vunpack.c.l.b16 %v102
  %v619 = vunpack.c.l.b16 %v103
  %v620 = vunpack.c.l.b16 %v104
  %v621 = vunpack.c.l.b16 %v105
  %v622 = vunpack.c.l.b16 %v106
  %v623 = vunpack.c.l.b16 %v107
  %v624 = vunpack.c.l.b16 %v108
  %v625 = vunpack.c.l.b16 %v109
  %v626 = vunpack.c.l.b16 %v110
  %v627 = vunpack.c.l.b16 %v111
  %v628 = vunpack.c.l.b16 %v112
  %v629 = vunpack.c.l.b16 %v113
  %v630 = vunpack.c.l.b16 %v114
  %v631 = vunpack.c.l.b16 %v115
  %v632 = vunpack.c.l.b16 %v116
  %v633 = vunpack.c.l.b16 %v117
  %v634 = vunpack.c.l.b16 %v118
  %v635 = vunpack.c.l.b16 %v119
  %v636 = vunpack.c.l.b16 %v120
  %v637 = vunpack.c.l.b16 %v121
  %v638 = vunpack.c.l.b16 %v122
  %v639 = vunpack.c.l.b16 %v123
  %v640 = vunpack.c.l.b16 %v124
  %v641 = vunpack.c.l.b16 %v125
  %v642 = vunpack.c.l.b16 %v126
  %v643 = vunpack.c.l.b16 %v127
  %v644 = vunpack.c.l.b16 %v128
  %v645 = vunpack.c.l.b16 %v129
  %v646 = vunpack.c.l.b16 %v130
  %v647 = vunpack.c.l.b16 %v131
  %v648 = vunpack.c.l.b16 %v132
  %v649 = vunpack.c.l.b16 %v133
  %v650 = vunpack.c.l.b16 %v134
  %v651 = vunpack.c.l.b16 %v135
  %v652 = vunpack.c.l.b16 %v136
  %v653 = vunpack.c.l.b16 %v137
  %v654 = vunpack.c.l.b16 %v138
  %v655 = vunpack.c.l.b16 %v139
  %v656 = vunpack.c.l.b16 %v140
  %v657 = vunpack.c.l.b16 %v141
  %v658 = vunpack.c.l.b16 %v142
  %v659 = vunpack.c.l.b16 %v143
  %v660 = vunpack.c.l.b16 %v144
  %v661 = vunpack.c.l.b16 %v145
  %v662 = vunpack.c.l.b16 %v146
  %v663 = vunpack.c.l.b16 %v147
  %v664 = vunpack.c.l.b16 %v148
  %v665 = vunpack.c.l.b16 %v149
  %v666 = vunpack.c.l.b16 %v150
  %v667 = vunpack.c.l.b16 %v151
  %v668 = vunpack.c.l.b16 %v152
  %v669 = vunpack.c.l.b16 %v153
  %v670 = vunpack.c.l.b16 %v154
  %v671 = vunpack.c.l.b16 %v155
  %v672 = vunpack.c.l.b16 %v156
  %v673 = vunpack.c.l.b16 %v157
  %v674 = vunpack.c.l.b16 %v158
  %v675 = vunpack.c.l.b16 %v159
  %v676 = vunpack.c.l.b16 %v160
  %v677 = vunpack.c.l.b16 %v161
  %v678 = vunpack.c.l.b16 %v162
  %v679 = vunpack.c.l.b16 %v163
  %v680 = vunpack.c.l.b16 %v164
  %v681 = vunpack.c.l.b16 %v165
  %v682 = vunpack.c.l.b16 %v166
  %v683 = vunpack.c.l.b16 %v167
  %v684 = vunpack.c.l.b16 %v168
  %v685 = vunpack.c.l.b16 %v169
  %v686 = vunpack.c.l.b16 %v170
  %v687 = vunpack.c.l.b16 %v171
  %v688 = vunpack.c.l.b16 %v172
  %v689 = vunpack.c.l.b16 %v173
  %v690 = vunpack.c.l.b16 %v174
  %v691 = vunpack.c.l.b16 %v175
  %v692 = vunpack.c.l.b16 %v176
  %v693 = vunpack.c.l.b16 %v177
  %v694 = vunpack.c.l.b16 %v178
  %v695 = vunpack.c.l.b16 %v179
  %v696 = vunpack.c.l.b16 %v180
  %v697 = vunpack.c.l.b16 %v181
  %v698 = vunpack.c.l.b16 %v182
  %v699 = vunpack.c.l.b16 %v183
  %v700 = vunpack.c.l.b16 %v184
  %v701 = vunpack.c.l.b16 %v185
  %v702 = vunpack.c.l.b16 %v186
  %v703 = vunpack.c.l.b16 %v187
  %v704 = vunpack.c.l.b16 %v188
  %v705 = vunpack.c.l.b16 %v189
  %v706 = vunpack.c.l.b16 %v190
  %v707 = vunpack.c.l.b16 %v191
  %v708 = vunpack.c.l.b16 %v192
  %v709 = vunpack.c.l.b16 %v193
  %v710 = vunpack.c.l.b16 %v194
  %v711 = vunpack.c.l.b16 %v195
  %v712 = vunpack.c.l.b16 %v196
  %v713 = vunpack.c.l.b16 %v197
  %v714 = vunpack.c.l.b16 %v198
  %v715 = vunpack.c.l.b16 %v199
  %v716 = vunpack.c.l.b16 %v200
  %v717 = vunpack.c.l.b16 %v201
  %v718 = vunpack.c.l.b16 %v202
  %v719 = vunpack.c.l.b16 %v203
  %v720 = vunpack.c.l.b16 %v204
  %v721 = vunpack.c.l.b16 %v205
  %v722 = vunpack.c.l.b16 %v206
  %v723 = vunpack.c.l.b16 %v207
  %v724 = vunpack.c.l.b16 %v208
  %v725 = vunpack.c.l.b16 %v209
  %v726 = vunpack.c.l.b16 %v210
  %v727 = vunpack.c.l.b16 %v211
  %v728 = vunpack.c.l.b16 %v212
  %v729 = vunpack.c.l.b16 %v213
  %v730 = vunpack.c.l.b16 %v214
  %v731 = vunpack.c.l.b16 %v215
  %v732 = vunpack.c.l.b16 %v216
  %v733 = vunpack.c.l.b16 %v217
  %v734 = vunpack.c.l.b16 %v218
  %v735 = vunpack.c.l.b16 %v219
  %v736 = vunpack.c.l.b16 %v220
  %v737 = vunpack.c.l.b16 %v221
  %v738 = vunpack.c.l.b16 %v222
  %v739 = vunpack.c.l.b16 %v223
  %v740 = vunpack.c.l.b16 %v224
  %v741 = vunpack.c.l.b16 %v225
  %v742 = vunpack.c.l.b16 %v226
  %v743 = vunpack.c.l.b16 %v227
  %v744 = vunpack.c.l.b16 %v228
  %v745 = vunpack.c.l.b16 %v229
  %v746 = vunpack.c.l.b16 %v230
  %v747 = vunpack.c.l.b16 %v231
  %v748 = vunpack.c.l.b16 %v232
  %v749 = vunpack.c.l.b16 %v233
  %v750 = vunpack.c.l.b16 %v234
  %v751 = vunpack.c.l.b16 %v235
  %v752 = vunpack.c.l.b16 %v236
  %v753 = vunpack.c.l.b16 %v237
  %v754 = vunpack.c.l.b16 %v238
  %v755 = vunpack.c.l.b16 %v239
  %v756 = vunpack.c.l.b16 %v240
  %v757 = vunpack.c.l.b16 %v241
  %v758 = vunpack.c.l.b16 %v242
  %v759 = vunpack.c.l.b16 %v243
  %v760 = vunpack.c.l.b16 %v244
  %v761 = vunpack.c.l.b16 %v245
  %v762 = vunpack.c.l.b16 %v246
  %v763 = vunpack.c.l.b16 %v247
  %v764 = vunpack.c.l.b16 %v248
  %v765 = vunpack.c.l.b16 %v249
  %v766 = vunpack.c.l.b16 %v250
  %v767 = vunpack.c.l.b16 %v251
  %v768 = vunpack.c.l.b16 %v252
  %v769 = vunpack.c.l.b16 %v253
  %v770 = vunpack.c.l.b16 %v254
  %v771 = vunpack.c.l.b16 %v255
  %v772 = vunpack.c.l.b16 %v256
  %v773 = vunpack.c.l.b16 %v257
  %v774 = vunpack.c.l.b16 %v258
  %v775 = vunpack.c.l.b16 %v259
  %v776 = vunpack.c.l.b16 %v260
  %v777 = vunpack.c.l.b16 %v261
  %v778 = vunpack.c.l.b16 %v262
  %v779 = vunpack.c.l.b16 %v263
  %v780 = vunpack.c.l.b16 %v264
  %v781 = vunpack.c.l.b16 %v265
  %v782 = vunpack.c.l.b16 %v266
  %v783 = vunpack.c.l.b16 %v267
  %v784 = vunpack.c.l.b16 %v268
  %v785 = vunpack.c.l.b16 %v269
  %v786 = vunpack.c.l.b16 %v270
  %v787 = vunpack.c.l.b16 %v271
  %v788 = vunpack.c.l.b16 %v272
  %v789 = vunpack.c.l.b16 %v273
  %v790 = vpack.c.b16 %v535, %v534
  %v791 = vpack.c.b16 %v537, %v536
  %v792 = vpack.c.b16 %v539, %v538
  %v793 = vpack.c.b16 %v541, %v540
  %v794 = vpack.c.b16 %v543, %v542
  %v795 = vpack.c.b16 %v545, %v544
  %v796 = vpack.c.b16 %v547, %v546
  %v797 = vpack.c.b16 %v549, %v548
  %v798 = vpack.c.b16 %v551, %v550
  %v799 = vpack.c.b16 %v553, %v552
  %v800 = vpack.c.b16 %v555, %v554
  %v801 = vpack.c.b16 %v557, %v556
  %v802 = vpack.c.b16 %v559, %v558
  %v803 = vpack.c.b16 %v561, %v560
  %v804 = vpack.c.b16 %v563, %v562
  %v805 = vpack.c.b16 %v565, %v564
  %v806 = vpack.c.b16 %v567, %v566
  %v807 = vpack.c.b16 %v569, %v568
  %v808 = vpack.c.b16 %v571, %v570
  %v809 = vpack.c.b16 %v573, %v572
  %v810 = vpack.c.b16 %v575, %v574
  %v811 = vpack.c.b16 %v577, %v576
  %v812 = vpack.c.b16 %v579, %v578
  %v813 = vpack.c.b16 %v581, %v580
  %v814 = vpack.c.b16 %v583, %v582
  %v815 = vpack.c.b16 %v585, %v584
  %v816 = vpack.c.b16 %v587, %v586
  %v817 = vpack.c.b16 %v589, %v588
  %v818 = vpack.c.b16 %v591, %v590
  %v819 = vpack.c.b16 %v593, %v592
  %v820 = vpack.c.b16 %v595, %v594
  %v821 = vpack.c.b16 %v597, %v596
  %v822 = vpack.c.b16 %v599, %v598
  %v823 = vpack.c.b16 %v601, %v600
  %v824 = vpack.c.b16 %v603, %v602
  %v825 = vpack.c.b16 %v605, %v604
  %v826 = vpack.c.b16 %v607, %v606
  %v827 = vpack.c.b16 %v609, %v608
  %v828 = vpack.c.b16 %v611, %v610
  %v829 = vpack.c.b16 %v613, %v612
  %v830 = vpack.c.b16 %v615, %v614
  %v831 = vpack.c.b16 %v617, %v616
  %v832 = vpack.c.b16 %v619, %v618
  %v833 = vpack.c.b16 %v621, %v620
  %v834 = vpack.c.b16 %v623, %v622
  %v835 = vpack.c.b16 %v625, %v624
  %v836 = vpack.c.b16 %v627, %v626
  %v837 = vpack.c.b16 %v629, %v628
  %v838 = vpack.c.b16 %v631, %v630
  %v839 = vpack.c.b16 %v633, %v632
  %v840 = vpack.c.b16 %v635, %v634
  %v841 = vpack.c.b16 %v637, %v636
  %v842 = vpack.c.b16 %v639, %v638
  %v843 = vpack.c.b16 %v641, %v640
  %v844 = vpack.c.b16 %v643, %v642
  %v845 = vpack.c.b16 %v645, %v644
  %v846 = vpack.c.b16 %v647, %v646
  %v847 = vpack.c.b16 %v649, %v648
  %v848 = vpack.c.b16 %v651, %v650
  %v849 = vpack.c.b16 %v653, %v652
  %v850 = vpack.c.b16 %v655, %v654
  %v851 = vpack.c.b16 %v657, %v656
  %v852 = vpack.c.b16 %v659, %v658
  %v853 = vpack.c.b16 %v661, %v660
  %v854 = vpack.c.b16 %v663, %v662
  %v855 = vpack.c.b16 %v665, %v664
  %v856 = vpack.c.b16 %v667, %v666
  %v857 = vpack.c.b16 %v669, %v668
  %v858 = vpack.c.b16 %v671, %v670
  %v859 = vpack.c.b16 %v673, %v672
  %v860 = vpack.c.b16 %v675, %v674
  %v861 = vpack.c.b16 %v677, %v676
  %v862 = vpack.c.b16 %v679, %v678
  %v863 = vpack.c.b16 %v681, %v680
  %v864 = vpack.c.b16 %v683, %v682
  %v865 = vpack.c.b16 %v685, %v684
  %v866 = vpack.c.b16 %v687, %v686
  %v867 = vpack.c.b16 %v689, %v688
  %v868 = vpack.c.b16 %v691, %v690
  %v869 = vpack.c.b16 %v693, %v692
  %v870 = vpack.c.b16 %v695, %v694
  %v871 = vpack.c.b16 %v697, %v696
  %v872 = vpack.c.b16 %v699, %v698
  %v873 = vpack.c.b16 %v701, %v700
  %v874 = vpack.c.b16 %v703, %v702
  %v875 = vpack.c.b16 %v705, %v704
  %v876 = vpack.c.b16 %v707, %v706
  %v877 = vpack.c.b16 %v709, %v708
  %v878 = vpack.c.b16 %v711, %v710
  %v879 = vpack.c.b16 %v713, %v712
  %v880 = vpack.c.b16 %v715, %v714
  %v881 = vpack.c.b16 %v717, %v716
  %v882 = vpack.c.b16 %v719, %v718
  %v883 = vpack.c.b16 %v721, %v720
  %v884 = vpack.c.b16 %v723, %v722
  %v885 = vpack.c.b16 %v725, %v724
  %v886 = vpack.c.b16 %v727, %v726
  %v887 = vpack.c.b16 %v729, %v728
  %v888 = vpack.c.b16 %v731, %v730
  %v889 = vpack.c.b16 %v733, %v732
  %v890 = vpack.c.b16 %v735, %v734
  %v891 = vpack.c.b16 %v737, %v736
  %v892 = vpack.c.b16 %v739, %v738
  %v893 = vpack.c.b16 %v741, %v740
  %v894 = vpack.c.b16 %v743, %v742
  %v895 = vpack.c.b16 %v745, %v744
  %v896 = vpack.c.b16 %v747, %v746
  %v897 = vpack.c.b16 %v749, %v748
  %v898 = vpack.c.b16 %v751, %v750
  %v899 = vpack.c.b16 %v753, %v752
  %v900 = vpack.c.b16 %v755, %v754
  %v901 = vpack.c.b16 %v757, %v756
  %v902 = vpack.c.b16 %v759, %v758
  %v903 = vpack.c.b16 %v761, %v760
  %v904 = vpack.c.b16 %v763, %v762
  %v905 = vpack.c.b16 %v765, %v764
  %v906 = vpack.c.b16 %v767, %v766
  %v907 = vpack.c.b16 %v769, %v768
  %v908 = vpack.c.b16 %v771, %v770
  %v909 = vpack.c.b16 %v773, %v772
  %v910 = vpack.c.b16 %v775, %v774
  %v911 = vpack.c.b16 %v777, %v776
  %v912 = vpack.c.b16 %v779, %v778
  %v913 = vpack.c.b16 %v781, %v780
  %v914 = vpack.c.b16 %v783, %v782
  %v915 = vpack.c.b16 %v785, %v784
  %v916 = vpack.c.b16 %v787, %v786
  %v917 = vpack.c.b16 %v789, %v788
  %v922 = vunpack.c.l.b16 %v274
  %v923 = vunpack.c.l.b16 %v275
  %v924 = vunpack.c.l.b16 %v276
  %v925 = vunpack.c.l.b16 %v277
  %v926 = vpack.c.b16 %v923, %v922
  %v927 = vpack.c.b16 %v925, %v924
  %vm930 = vcmask 261120
  %v932 = vsel %vm930, %v790, 0
  %v935 = vsel %vm930, %v791, 0
  %v938 = vsel %vm930, %v792, 0
  %v941 = vsel %vm930, %v793, 0
  %v944 = vsel %vm930, %v794, 0
  %v947 = vsel %vm930, %v795, 0
  %v950 = vsel %vm930, %v796, 0
  %v953 = vsel %vm930, %v797, 0
  %v956 = vsel %vm930, %v798, 0
  %v959 = vsel %vm930, %v799, 0
  %v962 = vsel %vm930, %v800, 0
  %v965 = vsel %vm930, %v801, 0
  %v968 = vsel %vm930, %v802, 0
  %v971 = vsel %vm930, %v803, 0
  %v974 = vsel %vm930, %v804, 0
  %v977 = vsel %vm930, %v805, 0
  %v980 = vsel %vm930, %v806, 0
  %v983 = vsel %vm930, %v807, 0
  %v986 = vsel %vm930, %v808, 0
  %v989 = vsel %vm930, %v809, 0
  %v992 = vsel %vm930, %v810, 0
  %v995 = vsel %vm930, %v811, 0
  %v998 = vsel %vm930, %v812, 0
  %v1001 = vsel %vm930, %v813, 0
  %v1004 = vsel %vm930, %v814, 0
  %v1007 = vsel %vm930, %v815, 0
  %v1010 = vsel %vm930, %v816, 0
  %v1013 = vsel %vm930, %v817, 0
  %v1016 = vsel %vm930, %v818, 0
  %v1019 = vsel %vm930, %v819, 0
  %v1022 = vsel %vm930, %v820, 0
  %v1025 = vsel %vm930, %v821, 0
  %v1028 = vsel %vm930, %v822, 0
  %v1031 = vsel %vm930, %v823, 0
  %v1034 = vsel %vm930, %v824, 0
  %v1037 = vsel %vm930, %v825, 0
  %v1040 = vsel %vm930, %v826, 0
  %v1043 = vsel %vm930, %v827, 0
  %v1046 = vsel %vm930, %v828, 0
  %v1049 = vsel %vm930, %v829, 0
  %v1052 = vsel %vm930, %v830, 0
  %v1055 = vsel %vm930, %v831, 0
  %v1058 = vsel %vm930, %v832, 0
  %v1061 = vsel %vm930, %v833, 0
  %v1064 = vsel %vm930, %v834, 0
  %v1067 = vsel %vm930, %v835, 0
  %v1070 = vsel %vm930, %v836, 0
  %v1073 = vsel %vm930, %v837, 0
  %v1076 = vsel %vm930, %v838, 0
  %v1079 = vsel %vm930, %v839, 0
  %v1082 = vsel %vm930, %v840, 0
  %v1085 = vsel %vm930, %v841, 0
  %v1088 = vsel %vm930, %v842, 0
  %v1091 = vsel %vm930, %v843, 0
  %v1094 = vsel %vm930, %v844, 0
  %v1097 = vsel %vm930, %v845, 0
  %v1100 = vsel %vm930, %v846, 0
  %v1103 = vsel %vm930, %v847, 0
  %v1106 = vsel %vm930, %v848, 0
  %v1109 = vsel %vm930, %v849, 0
  %v1112 = vsel %vm930, %v850, 0
  %v1115 = vsel %vm930, %v851, 0
  %v1118 = vsel %vm930, %v852, 0
  %v1121 = vsel %vm930, %v853, 0
  %v1124 = vsel %vm930, %v854, 0
  %v1127 = vsel %vm930, %v855, 0
  %v1130 = vsel %vm930, %v856, 0
  %v1133 = vsel %vm930, %v857, 0
  %v1136 = vsel %vm930, %v858, 0
  %v1139 = vsel %vm930, %v859, 0
  %v1142 = vsel %vm930, %v860, 0
  %v1145 = vsel %vm930, %v861, 0
  %v1148 = vsel %vm930, %v862, 0
  %v1151 = vsel %vm930, %v863, 0
  %v1154 = vsel %vm930, %v864, 0
  %v1157 = vsel %vm930, %v865, 0
  %v1160 = vsel %vm930, %v866, 0
  %v1163 = vsel %vm930, %v867, 0
  %v1166 = vsel %vm930, %v868, 0
  %v1169 = vsel %vm930, %v869, 0
  %v1172 = vsel %vm930, %v870, 0
  %v1175 = vsel %vm930, %v871, 0
  %v1178 = vsel %vm930, %v872, 0
  %v1181 = vsel %vm930, %v873, 0
  %v1184 = vsel %vm930, %v874, 0
  %v1187 = vsel %vm930, %v875, 0
  %v1190 = vsel %vm930, %v876, 0
  %v1193 = vsel %vm930, %v877, 0
  %v1196 = vsel %vm930, %v878, 0
  %v1199 = vsel %vm930, %v879, 0
  %v1202 = vsel %vm930, %v880, 0
  %v1205 = vsel %vm930, %v881, 0
  %v1208 = vsel %vm930, %v882, 0
  %v1211 = vsel %vm930, %v883, 0
  %v1214 = vsel %vm930, %v884, 0
  %v1217 = vsel %vm930, %v885, 0
  %v1220 = vsel %vm930, %v886, 0
  %v1223 = vsel %vm930, %v887, 0
  %v1226 = vsel %vm930, %v888, 0
  %v1229 = vsel %vm930, %v889, 0
  %v1232 = vsel %vm930, %v890, 0
  %v1235 = vsel %vm930, %v891, 0
  %v1238 = vsel %vm930, %v892, 0
  %v1241 = vsel %vm930, %v893, 0
  %v1244 = vsel %vm930, %v894, 0
  %v1247 = vsel %vm930, %v895, 0
  %v1250 = vsel %vm930, %v896, 0
  %v1253 = vsel %vm930, %v897, 0
  %v1256 = vsel %vm930, %v898, 0
  %v1259 = vsel %vm930, %v899, 0
  %v1262 = vsel %vm930, %v900, 0
  %v1265 = vsel %vm930, %v901, 0
  %v1268 = vsel %vm930, %v902, 0
  %v1271 = vsel %vm930, %v903, 0
  %v1274 = vsel %vm930, %v904, 0
  %v1277 = vsel %vm930, %v905, 0
  %v1280 = vsel %vm930, %v906, 0
  %v1283 = vsel %vm930, %v907, 0
  %v1286 = vsel %vm930, %v908, 0
  %v1289 = vsel %vm930, %v909, 0
  %v1292 = vsel %vm930, %v910, 0
  %v1295 = vsel %vm930, %v911, 0
  %v1298 = vsel %vm930, %v912, 0
  %v1301 = vsel %vm930, %v913, 0
  %v1304 = vsel %vm930, %v914, 0
  %v1307 = vsel %vm930, %v915, 0
  %v1310 = vsel %vm930, %v916, 0
  %v1313 = vsel %vm930, %v917, 0
  %1315 = vmatpush.bf16.msra.mxu0 0
  %1316 = vmatpush.bf16.msra.mxu0 0
  %1317 = vmatpush.bf16.msra.mxu0 0
  %1318 = vmatpush.bf16.msra.mxu0 0
  %1319 = vmatpush.bf16.msra.mxu0 0
  %1320 = vmatpush.bf16.msra.mxu0 0
  %1321 = vmatpush.bf16.msra.mxu0 %v927
  %1322 = vmatpush.bf16.msra.mxu0 %v926
  %1323 = vmatmul.bf16.gmra.mxu0 %v932
  %v1324 = vpop.f32.mrf.mxu0
  %v1325 = vadd.f32 0.0, %v1324
  %v1326 = vpop.f32.mrf.mxu0
  %v1327 = vadd.f32 0.0, %v1326
  %1328 = vmatmul.bf16.gmra.mxu0 %v935
  %v1329 = vpop.f32.mrf.mxu0
  %v1330 = vadd.f32 0.0, %v1329
  %v1331 = vpop.f32.mrf.mxu0
  %v1332 = vadd.f32 0.0, %v1331
  %1333 = vmatmul.bf16.gmra.mxu0 %v938
  %v1334 = vpop.f32.mrf.mxu0
  %v1335 = vadd.f32 0.0, %v1334
  %v1336 = vpop.f32.mrf.mxu0
  %v1337 = vadd.f32 0.0, %v1336
  %1338 = vmatmul.bf16.gmra.mxu0 %v941
  %v1339 = vpop.f32.mrf.mxu0
  %v1340 = vadd.f32 0.0, %v1339
  %v1341 = vpop.f32.mrf.mxu0
  %v1342 = vadd.f32 0.0, %v1341
  %1343 = vmatmul.bf16.gmra.mxu0 %v944
  %v1344 = vpop.f32.mrf.mxu0
  %v1345 = vadd.f32 0.0, %v1344
  %v1346 = vpop.f32.mrf.mxu0
  %v1347 = vadd.f32 0.0, %v1346
  %1348 = vmatmul.bf16.gmra.mxu0 %v947
  %v1349 = vpop.f32.mrf.mxu0
  %v1350 = vadd.f32 0.0, %v1349
  %v1351 = vpop.f32.mrf.mxu0
  %v1352 = vadd.f32 0.0, %v1351
  %1353 = vmatmul.bf16.gmra.mxu0 %v950
  %v1354 = vpop.f32.mrf.mxu0
  %v1355 = vadd.f32 0.0, %v1354
  %v1356 = vpop.f32.mrf.mxu0
  %v1357 = vadd.f32 0.0, %v1356
  %1358 = vmatmul.bf16.gmra.mxu0 %v953
  %v1359 = vpop.f32.mrf.mxu0
  %v1360 = vadd.f32 0.0, %v1359
  %v1361 = vpop.f32.mrf.mxu0
  %v1362 = vadd.f32 0.0, %v1361
  %1363 = vmatmul.bf16.gmra.mxu0 %v956
  %v1364 = vpop.f32.mrf.mxu0
  %v1365 = vadd.f32 0.0, %v1364
  %v1366 = vpop.f32.mrf.mxu0
  %v1367 = vadd.f32 0.0, %v1366
  %1368 = vmatmul.bf16.gmra.mxu0 %v959
  %v1369 = vpop.f32.mrf.mxu0
  %v1370 = vadd.f32 0.0, %v1369
  %v1371 = vpop.f32.mrf.mxu0
  %v1372 = vadd.f32 0.0, %v1371
  %1373 = vmatmul.bf16.gmra.mxu0 %v962
  %v1374 = vpop.f32.mrf.mxu0
  %v1375 = vadd.f32 0.0, %v1374
  %v1376 = vpop.f32.mrf.mxu0
  %v1377 = vadd.f32 0.0, %v1376
  %1378 = vmatmul.bf16.gmra.mxu0 %v965
  %v1379 = vpop.f32.mrf.mxu0
  %v1380 = vadd.f32 0.0, %v1379
  %v1381 = vpop.f32.mrf.mxu0
  %v1382 = vadd.f32 0.0, %v1381
  %1383 = vmatmul.bf16.gmra.mxu0 %v968
  %v1384 = vpop.f32.mrf.mxu0
  %v1385 = vadd.f32 0.0, %v1384
  %v1386 = vpop.f32.mrf.mxu0
  %v1387 = vadd.f32 0.0, %v1386
  %1388 = vmatmul.bf16.gmra.mxu0 %v971
  %v1389 = vpop.f32.mrf.mxu0
  %v1390 = vadd.f32 0.0, %v1389
  %v1391 = vpop.f32.mrf.mxu0
  %v1392 = vadd.f32 0.0, %v1391
  %1393 = vmatmul.bf16.gmra.mxu0 %v974
  %v1394 = vpop.f32.mrf.mxu0
  %v1395 = vadd.f32 0.0, %v1394
  %v1396 = vpop.f32.mrf.mxu0
  %v1397 = vadd.f32 0.0, %v1396
  %1398 = vmatmul.bf16.gmra.mxu0 %v977
  %v1399 = vpop.f32.mrf.mxu0
  %v1400 = vadd.f32 0.0, %v1399
  %v1401 = vpop.f32.mrf.mxu0
  %v1402 = vadd.f32 0.0, %v1401
  %1403 = vmatmul.bf16.gmra.mxu0 %v980
  %v1404 = vpop.f32.mrf.mxu0
  %v1405 = vadd.f32 0.0, %v1404
  %v1406 = vpop.f32.mrf.mxu0
  %v1407 = vadd.f32 0.0, %v1406
  %1408 = vmatmul.bf16.gmra.mxu0 %v983
  %v1409 = vpop.f32.mrf.mxu0
  %v1410 = vadd.f32 0.0, %v1409
  %v1411 = vpop.f32.mrf.mxu0
  %v1412 = vadd.f32 0.0, %v1411
  %1413 = vmatmul.bf16.gmra.mxu0 %v986
  %v1414 = vpop.f32.mrf.mxu0
  %v1415 = vadd.f32 0.0, %v1414
  %v1416 = vpop.f32.mrf.mxu0
  %v1417 = vadd.f32 0.0, %v1416
  %1418 = vmatmul.bf16.gmra.mxu0 %v989
  %v1419 = vpop.f32.mrf.mxu0
  %v1420 = vadd.f32 0.0, %v1419
  %v1421 = vpop.f32.mrf.mxu0
  %v1422 = vadd.f32 0.0, %v1421
  %1423 = vmatmul.bf16.gmra.mxu0 %v992
  %v1424 = vpop.f32.mrf.mxu0
  %v1425 = vadd.f32 0.0, %v1424
  %v1426 = vpop.f32.mrf.mxu0
  %v1427 = vadd.f32 0.0, %v1426
  %1428 = vmatmul.bf16.gmra.mxu0 %v995
  %v1429 = vpop.f32.mrf.mxu0
  %v1430 = vadd.f32 0.0, %v1429
  %v1431 = vpop.f32.mrf.mxu0
  %v1432 = vadd.f32 0.0, %v1431
  %1433 = vmatmul.bf16.gmra.mxu0 %v998
  %v1434 = vpop.f32.mrf.mxu0
  %v1435 = vadd.f32 0.0, %v1434
  %v1436 = vpop.f32.mrf.mxu0
  %v1437 = vadd.f32 0.0, %v1436
  %1438 = vmatmul.bf16.gmra.mxu0 %v1001
  %v1439 = vpop.f32.mrf.mxu0
  %v1440 = vadd.f32 0.0, %v1439
  %v1441 = vpop.f32.mrf.mxu0
  %v1442 = vadd.f32 0.0, %v1441
  %1443 = vmatmul.bf16.gmra.mxu0 %v1004
  %v1444 = vpop.f32.mrf.mxu0
  %v1445 = vadd.f32 0.0, %v1444
  %v1446 = vpop.f32.mrf.mxu0
  %v1447 = vadd.f32 0.0, %v1446
  %1448 = vmatmul.bf16.gmra.mxu0 %v1007
  %v1449 = vpop.f32.mrf.mxu0
  %v1450 = vadd.f32 0.0, %v1449
  %v1451 = vpop.f32.mrf.mxu0
  %v1452 = vadd.f32 0.0, %v1451
  %1453 = vmatmul.bf16.gmra.mxu0 %v1010
  %v1454 = vpop.f32.mrf.mxu0
  %v1455 = vadd.f32 0.0, %v1454
  %v1456 = vpop.f32.mrf.mxu0
  %v1457 = vadd.f32 0.0, %v1456
  %1458 = vmatmul.bf16.gmra.mxu0 %v1013
  %v1459 = vpop.f32.mrf.mxu0
  %v1460 = vadd.f32 0.0, %v1459
  %v1461 = vpop.f32.mrf.mxu0
  %v1462 = vadd.f32 0.0, %v1461
  %1463 = vmatmul.bf16.gmra.mxu0 %v1016
  %v1464 = vpop.f32.mrf.mxu0
  %v1465 = vadd.f32 0.0, %v1464
  %v1466 = vpop.f32.mrf.mxu0
  %v1467 = vadd.f32 0.0, %v1466
  %1468 = vmatmul.bf16.gmra.mxu0 %v1019
  %v1469 = vpop.f32.mrf.mxu0
  %v1470 = vadd.f32 0.0, %v1469
  %v1471 = vpop.f32.mrf.mxu0
  %v1472 = vadd.f32 0.0, %v1471
  %1473 = vmatmul.bf16.gmra.mxu0 %v1022
  %v1474 = vpop.f32.mrf.mxu0
  %v1475 = vadd.f32 0.0, %v1474
  %v1476 = vpop.f32.mrf.mxu0
  %v1477 = vadd.f32 0.0, %v1476
  %1478 = vmatmul.bf16.gmra.mxu0 %v1025
  %v1479 = vpop.f32.mrf.mxu0
  %v1480 = vadd.f32 0.0, %v1479
  %v1481 = vpop.f32.mrf.mxu0
  %v1482 = vadd.f32 0.0, %v1481
  %1483 = vmatmul.bf16.gmra.mxu0 %v1028
  %v1484 = vpop.f32.mrf.mxu0
  %v1485 = vadd.f32 0.0, %v1484
  %v1486 = vpop.f32.mrf.mxu0
  %v1487 = vadd.f32 0.0, %v1486
  %1488 = vmatmul.bf16.gmra.mxu0 %v1031
  %v1489 = vpop.f32.mrf.mxu0
  %v1490 = vadd.f32 0.0, %v1489
  %v1491 = vpop.f32.mrf.mxu0
  %v1492 = vadd.f32 0.0, %v1491
  %1493 = vmatmul.bf16.gmra.mxu0 %v1034
  %v1494 = vpop.f32.mrf.mxu0
  %v1495 = vadd.f32 0.0, %v1494
  %v1496 = vpop.f32.mrf.mxu0
  %v1497 = vadd.f32 0.0, %v1496
  %1498 = vmatmul.bf16.gmra.mxu0 %v1037
  %v1499 = vpop.f32.mrf.mxu0
  %v1500 = vadd.f32 0.0, %v1499
  %v1501 = vpop.f32.mrf.mxu0
  %v1502 = vadd.f32 0.0, %v1501
  %1503 = vmatmul.bf16.gmra.mxu0 %v1040
  %v1504 = vpop.f32.mrf.mxu0
  %v1505 = vadd.f32 0.0, %v1504
  %v1506 = vpop.f32.mrf.mxu0
  %v1507 = vadd.f32 0.0, %v1506
  %1508 = vmatmul.bf16.gmra.mxu0 %v1043
  %v1509 = vpop.f32.mrf.mxu0
  %v1510 = vadd.f32 0.0, %v1509
  %v1511 = vpop.f32.mrf.mxu0
  %v1512 = vadd.f32 0.0, %v1511
  %1513 = vmatmul.bf16.gmra.mxu0 %v1046
  %v1514 = vpop.f32.mrf.mxu0
  %v1515 = vadd.f32 0.0, %v1514
  %v1516 = vpop.f32.mrf.mxu0
  %v1517 = vadd.f32 0.0, %v1516
  %1518 = vmatmul.bf16.gmra.mxu0 %v1049
  %v1519 = vpop.f32.mrf.mxu0
  %v1520 = vadd.f32 0.0, %v1519
  %v1521 = vpop.f32.mrf.mxu0
  %v1522 = vadd.f32 0.0, %v1521
  %1523 = vmatmul.bf16.gmra.mxu0 %v1052
  %v1524 = vpop.f32.mrf.mxu0
  %v1525 = vadd.f32 0.0, %v1524
  %v1526 = vpop.f32.mrf.mxu0
  %v1527 = vadd.f32 0.0, %v1526
  %1528 = vmatmul.bf16.gmra.mxu0 %v1055
  %v1529 = vpop.f32.mrf.mxu0
  %v1530 = vadd.f32 0.0, %v1529
  %v1531 = vpop.f32.mrf.mxu0
  %v1532 = vadd.f32 0.0, %v1531
  %1533 = vmatmul.bf16.gmra.mxu0 %v1058
  %v1534 = vpop.f32.mrf.mxu0
  %v1535 = vadd.f32 0.0, %v1534
  %v1536 = vpop.f32.mrf.mxu0
  %v1537 = vadd.f32 0.0, %v1536
  %1538 = vmatmul.bf16.gmra.mxu0 %v1061
  %v1539 = vpop.f32.mrf.mxu0
  %v1540 = vadd.f32 0.0, %v1539
  %v1541 = vpop.f32.mrf.mxu0
  %v1542 = vadd.f32 0.0, %v1541
  %1543 = vmatmul.bf16.gmra.mxu0 %v1064
  %v1544 = vpop.f32.mrf.mxu0
  %v1545 = vadd.f32 0.0, %v1544
  %v1546 = vpop.f32.mrf.mxu0
  %v1547 = vadd.f32 0.0, %v1546
  %1548 = vmatmul.bf16.gmra.mxu0 %v1067
  %v1549 = vpop.f32.mrf.mxu0
  %v1550 = vadd.f32 0.0, %v1549
  %v1551 = vpop.f32.mrf.mxu0
  %v1552 = vadd.f32 0.0, %v1551
  %1553 = vmatmul.bf16.gmra.mxu0 %v1070
  %v1554 = vpop.f32.mrf.mxu0
  %v1555 = vadd.f32 0.0, %v1554
  %v1556 = vpop.f32.mrf.mxu0
  %v1557 = vadd.f32 0.0, %v1556
  %1558 = vmatmul.bf16.gmra.mxu0 %v1073
  %v1559 = vpop.f32.mrf.mxu0
  %v1560 = vadd.f32 0.0, %v1559
  %v1561 = vpop.f32.mrf.mxu0
  %v1562 = vadd.f32 0.0, %v1561
  %1563 = vmatmul.bf16.gmra.mxu0 %v1076
  %v1564 = vpop.f32.mrf.mxu0
  %v1565 = vadd.f32 0.0, %v1564
  %v1566 = vpop.f32.mrf.mxu0
  %v1567 = vadd.f32 0.0, %v1566
  %1568 = vmatmul.bf16.gmra.mxu0 %v1079
  %v1569 = vpop.f32.mrf.mxu0
  %v1570 = vadd.f32 0.0, %v1569
  %v1571 = vpop.f32.mrf.mxu0
  %v1572 = vadd.f32 0.0, %v1571
  %1573 = vmatmul.bf16.gmra.mxu0 %v1082
  %v1574 = vpop.f32.mrf.mxu0
  %v1575 = vadd.f32 0.0, %v1574
  %v1576 = vpop.f32.mrf.mxu0
  %v1577 = vadd.f32 0.0, %v1576
  %1578 = vmatmul.bf16.gmra.mxu0 %v1085
  %v1579 = vpop.f32.mrf.mxu0
  %v1580 = vadd.f32 0.0, %v1579
  %v1581 = vpop.f32.mrf.mxu0
  %v1582 = vadd.f32 0.0, %v1581
  %1583 = vmatmul.bf16.gmra.mxu0 %v1088
  %v1584 = vpop.f32.mrf.mxu0
  %v1585 = vadd.f32 0.0, %v1584
  %v1586 = vpop.f32.mrf.mxu0
  %v1587 = vadd.f32 0.0, %v1586
  %1588 = vmatmul.bf16.gmra.mxu0 %v1091
  %v1589 = vpop.f32.mrf.mxu0
  %v1590 = vadd.f32 0.0, %v1589
  %v1591 = vpop.f32.mrf.mxu0
  %v1592 = vadd.f32 0.0, %v1591
  %1593 = vmatmul.bf16.gmra.mxu0 %v1094
  %v1594 = vpop.f32.mrf.mxu0
  %v1595 = vadd.f32 0.0, %v1594
  %v1596 = vpop.f32.mrf.mxu0
  %v1597 = vadd.f32 0.0, %v1596
  %1598 = vmatmul.bf16.gmra.mxu0 %v1097
  %v1599 = vpop.f32.mrf.mxu0
  %v1600 = vadd.f32 0.0, %v1599
  %v1601 = vpop.f32.mrf.mxu0
  %v1602 = vadd.f32 0.0, %v1601
  %1603 = vmatmul.bf16.gmra.mxu0 %v1100
  %v1604 = vpop.f32.mrf.mxu0
  %v1605 = vadd.f32 0.0, %v1604
  %v1606 = vpop.f32.mrf.mxu0
  %v1607 = vadd.f32 0.0, %v1606
  %1608 = vmatmul.bf16.gmra.mxu0 %v1103
  %v1609 = vpop.f32.mrf.mxu0
  %v1610 = vadd.f32 0.0, %v1609
  %v1611 = vpop.f32.mrf.mxu0
  %v1612 = vadd.f32 0.0, %v1611
  %1613 = vmatmul.bf16.gmra.mxu0 %v1106
  %v1614 = vpop.f32.mrf.mxu0
  %v1615 = vadd.f32 0.0, %v1614
  %v1616 = vpop.f32.mrf.mxu0
  %v1617 = vadd.f32 0.0, %v1616
  %1618 = vmatmul.bf16.gmra.mxu0 %v1109
  %v1619 = vpop.f32.mrf.mxu0
  %v1620 = vadd.f32 0.0, %v1619
  %v1621 = vpop.f32.mrf.mxu0
  %v1622 = vadd.f32 0.0, %v1621
  %1623 = vmatmul.bf16.gmra.mxu0 %v1112
  %v1624 = vpop.f32.mrf.mxu0
  %v1625 = vadd.f32 0.0, %v1624
  %v1626 = vpop.f32.mrf.mxu0
  %v1627 = vadd.f32 0.0, %v1626
  %1628 = vmatmul.bf16.gmra.mxu0 %v1115
  %v1629 = vpop.f32.mrf.mxu0
  %v1630 = vadd.f32 0.0, %v1629
  %v1631 = vpop.f32.mrf.mxu0
  %v1632 = vadd.f32 0.0, %v1631
  %1633 = vmatmul.bf16.gmra.mxu0 %v1118
  %v1634 = vpop.f32.mrf.mxu0
  %v1635 = vadd.f32 0.0, %v1634
  %v1636 = vpop.f32.mrf.mxu0
  %v1637 = vadd.f32 0.0, %v1636
  %1638 = vmatmul.bf16.gmra.mxu0 %v1121
  %v1639 = vpop.f32.mrf.mxu0
  %v1640 = vadd.f32 0.0, %v1639
  %v1641 = vpop.f32.mrf.mxu0
  %v1642 = vadd.f32 0.0, %v1641
  %1643 = vmatmul.bf16.gmra.mxu0 %v1124
  %v1644 = vpop.f32.mrf.mxu0
  %v1645 = vadd.f32 0.0, %v1644
  %v1646 = vpop.f32.mrf.mxu0
  %v1647 = vadd.f32 0.0, %v1646
  %1648 = vmatmul.bf16.gmra.mxu0 %v1127
  %v1649 = vpop.f32.mrf.mxu0
  %v1650 = vadd.f32 0.0, %v1649
  %v1651 = vpop.f32.mrf.mxu0
  %v1652 = vadd.f32 0.0, %v1651
  %1653 = vmatmul.bf16.gmra.mxu0 %v1130
  %v1654 = vpop.f32.mrf.mxu0
  %v1655 = vadd.f32 0.0, %v1654
  %v1656 = vpop.f32.mrf.mxu0
  %v1657 = vadd.f32 0.0, %v1656
  %1658 = vmatmul.bf16.gmra.mxu0 %v1133
  %v1659 = vpop.f32.mrf.mxu0
  %v1660 = vadd.f32 0.0, %v1659
  %v1661 = vpop.f32.mrf.mxu0
  %v1662 = vadd.f32 0.0, %v1661
  %1663 = vmatmul.bf16.gmra.mxu0 %v1136
  %v1664 = vpop.f32.mrf.mxu0
  %v1665 = vadd.f32 0.0, %v1664
  %v1666 = vpop.f32.mrf.mxu0
  %v1667 = vadd.f32 0.0, %v1666
  %1668 = vmatmul.bf16.gmra.mxu0 %v1139
  %v1669 = vpop.f32.mrf.mxu0
  %v1670 = vadd.f32 0.0, %v1669
  %v1671 = vpop.f32.mrf.mxu0
  %v1672 = vadd.f32 0.0, %v1671
  %1673 = vmatmul.bf16.gmra.mxu0 %v1142
  %v1674 = vpop.f32.mrf.mxu0
  %v1675 = vadd.f32 0.0, %v1674
  %v1676 = vpop.f32.mrf.mxu0
  %v1677 = vadd.f32 0.0, %v1676
  %1678 = vmatmul.bf16.gmra.mxu0 %v1145
  %v1679 = vpop.f32.mrf.mxu0
  %v1680 = vadd.f32 0.0, %v1679
  %v1681 = vpop.f32.mrf.mxu0
  %v1682 = vadd.f32 0.0, %v1681
  %1683 = vmatmul.bf16.gmra.mxu0 %v1148
  %v1684 = vpop.f32.mrf.mxu0
  %v1685 = vadd.f32 0.0, %v1684
  %v1686 = vpop.f32.mrf.mxu0
  %v1687 = vadd.f32 0.0, %v1686
  %1688 = vmatmul.bf16.gmra.mxu0 %v1151
  %v1689 = vpop.f32.mrf.mxu0
  %v1690 = vadd.f32 0.0, %v1689
  %v1691 = vpop.f32.mrf.mxu0
  %v1692 = vadd.f32 0.0, %v1691
  %1693 = vmatmul.bf16.gmra.mxu0 %v1154
  %v1694 = vpop.f32.mrf.mxu0
  %v1695 = vadd.f32 0.0, %v1694
  %v1696 = vpop.f32.mrf.mxu0
  %v1697 = vadd.f32 0.0, %v1696
  %1698 = vmatmul.bf16.gmra.mxu0 %v1157
  %v1699 = vpop.f32.mrf.mxu0
  %v1700 = vadd.f32 0.0, %v1699
  %v1701 = vpop.f32.mrf.mxu0
  %v1702 = vadd.f32 0.0, %v1701
  %1703 = vmatmul.bf16.gmra.mxu0 %v1160
  %v1704 = vpop.f32.mrf.mxu0
  %v1705 = vadd.f32 0.0, %v1704
  %v1706 = vpop.f32.mrf.mxu0
  %v1707 = vadd.f32 0.0, %v1706
  %1708 = vmatmul.bf16.gmra.mxu0 %v1163
  %v1709 = vpop.f32.mrf.mxu0
  %v1710 = vadd.f32 0.0, %v1709
  %v1711 = vpop.f32.mrf.mxu0
  %v1712 = vadd.f32 0.0, %v1711
  %1713 = vmatmul.bf16.gmra.mxu0 %v1166
  %v1714 = vpop.f32.mrf.mxu0
  %v1715 = vadd.f32 0.0, %v1714
  %v1716 = vpop.f32.mrf.mxu0
  %v1717 = vadd.f32 0.0, %v1716
  %1718 = vmatmul.bf16.gmra.mxu0 %v1169
  %v1719 = vpop.f32.mrf.mxu0
  %v1720 = vadd.f32 0.0, %v1719
  %v1721 = vpop.f32.mrf.mxu0
  %v1722 = vadd.f32 0.0, %v1721
  %1723 = vmatmul.bf16.gmra.mxu0 %v1172
  %v1724 = vpop.f32.mrf.mxu0
  %v1725 = vadd.f32 0.0, %v1724
  %v1726 = vpop.f32.mrf.mxu0
  %v1727 = vadd.f32 0.0, %v1726
  %1728 = vmatmul.bf16.gmra.mxu0 %v1175
  %v1729 = vpop.f32.mrf.mxu0
  %v1730 = vadd.f32 0.0, %v1729
  %v1731 = vpop.f32.mrf.mxu0
  %v1732 = vadd.f32 0.0, %v1731
  %1733 = vmatmul.bf16.gmra.mxu0 %v1178
  %v1734 = vpop.f32.mrf.mxu0
  %v1735 = vadd.f32 0.0, %v1734
  %v1736 = vpop.f32.mrf.mxu0
  %v1737 = vadd.f32 0.0, %v1736
  %1738 = vmatmul.bf16.gmra.mxu0 %v1181
  %v1739 = vpop.f32.mrf.mxu0
  %v1740 = vadd.f32 0.0, %v1739
  %v1741 = vpop.f32.mrf.mxu0
  %v1742 = vadd.f32 0.0, %v1741
  %1743 = vmatmul.bf16.gmra.mxu0 %v1184
  %v1744 = vpop.f32.mrf.mxu0
  %v1745 = vadd.f32 0.0, %v1744
  %v1746 = vpop.f32.mrf.mxu0
  %v1747 = vadd.f32 0.0, %v1746
  %1748 = vmatmul.bf16.gmra.mxu0 %v1187
  %v1749 = vpop.f32.mrf.mxu0
  %v1750 = vadd.f32 0.0, %v1749
  %v1751 = vpop.f32.mrf.mxu0
  %v1752 = vadd.f32 0.0, %v1751
  %1753 = vmatmul.bf16.gmra.mxu0 %v1190
  %v1754 = vpop.f32.mrf.mxu0
  %v1755 = vadd.f32 0.0, %v1754
  %v1756 = vpop.f32.mrf.mxu0
  %v1757 = vadd.f32 0.0, %v1756
  %1758 = vmatmul.bf16.gmra.mxu0 %v1193
  %v1759 = vpop.f32.mrf.mxu0
  %v1760 = vadd.f32 0.0, %v1759
  %v1761 = vpop.f32.mrf.mxu0
  %v1762 = vadd.f32 0.0, %v1761
  %1763 = vmatmul.bf16.gmra.mxu0 %v1196
  %v1764 = vpop.f32.mrf.mxu0
  %v1765 = vadd.f32 0.0, %v1764
  %v1766 = vpop.f32.mrf.mxu0
  %v1767 = vadd.f32 0.0, %v1766
  %1768 = vmatmul.bf16.gmra.mxu0 %v1199
  %v1769 = vpop.f32.mrf.mxu0
  %v1770 = vadd.f32 0.0, %v1769
  %v1771 = vpop.f32.mrf.mxu0
  %v1772 = vadd.f32 0.0, %v1771
  %1773 = vmatmul.bf16.gmra.mxu0 %v1202
  %v1774 = vpop.f32.mrf.mxu0
  %v1775 = vadd.f32 0.0, %v1774
  %v1776 = vpop.f32.mrf.mxu0
  %v1777 = vadd.f32 0.0, %v1776
  %1778 = vmatmul.bf16.gmra.mxu0 %v1205
  %v1779 = vpop.f32.mrf.mxu0
  %v1780 = vadd.f32 0.0, %v1779
  %v1781 = vpop.f32.mrf.mxu0
  %v1782 = vadd.f32 0.0, %v1781
  %1783 = vmatmul.bf16.gmra.mxu0 %v1208
  %v1784 = vpop.f32.mrf.mxu0
  %v1785 = vadd.f32 0.0, %v1784
  %v1786 = vpop.f32.mrf.mxu0
  %v1787 = vadd.f32 0.0, %v1786
  %1788 = vmatmul.bf16.gmra.mxu0 %v1211
  %v1789 = vpop.f32.mrf.mxu0
  %v1790 = vadd.f32 0.0, %v1789
  %v1791 = vpop.f32.mrf.mxu0
  %v1792 = vadd.f32 0.0, %v1791
  %1793 = vmatmul.bf16.gmra.mxu0 %v1214
  %v1794 = vpop.f32.mrf.mxu0
  %v1795 = vadd.f32 0.0, %v1794
  %v1796 = vpop.f32.mrf.mxu0
  %v1797 = vadd.f32 0.0, %v1796
  %1798 = vmatmul.bf16.gmra.mxu0 %v1217
  %v1799 = vpop.f32.mrf.mxu0
  %v1800 = vadd.f32 0.0, %v1799
  %v1801 = vpop.f32.mrf.mxu0
  %v1802 = vadd.f32 0.0, %v1801
  %1803 = vmatmul.bf16.gmra.mxu0 %v1220
  %v1804 = vpop.f32.mrf.mxu0
  %v1805 = vadd.f32 0.0, %v1804
  %v1806 = vpop.f32.mrf.mxu0
  %v1807 = vadd.f32 0.0, %v1806
  %1808 = vmatmul.bf16.gmra.mxu0 %v1223
  %v1809 = vpop.f32.mrf.mxu0
  %v1810 = vadd.f32 0.0, %v1809
  %v1811 = vpop.f32.mrf.mxu0
  %v1812 = vadd.f32 0.0, %v1811
  %1813 = vmatmul.bf16.gmra.mxu0 %v1226
  %v1814 = vpop.f32.mrf.mxu0
  %v1815 = vadd.f32 0.0, %v1814
  %v1816 = vpop.f32.mrf.mxu0
  %v1817 = vadd.f32 0.0, %v1816
  %1818 = vmatmul.bf16.gmra.mxu0 %v1229
  %v1819 = vpop.f32.mrf.mxu0
  %v1820 = vadd.f32 0.0, %v1819
  %v1821 = vpop.f32.mrf.mxu0
  %v1822 = vadd.f32 0.0, %v1821
  %1823 = vmatmul.bf16.gmra.mxu0 %v1232
  %v1824 = vpop.f32.mrf.mxu0
  %v1825 = vadd.f32 0.0, %v1824
  %v1826 = vpop.f32.mrf.mxu0
  %v1827 = vadd.f32 0.0, %v1826
  %1828 = vmatmul.bf16.gmra.mxu0 %v1235
  %v1829 = vpop.f32.mrf.mxu0
  %v1830 = vadd.f32 0.0, %v1829
  %v1831 = vpop.f32.mrf.mxu0
  %v1832 = vadd.f32 0.0, %v1831
  %1833 = vmatmul.bf16.gmra.mxu0 %v1238
  %v1834 = vpop.f32.mrf.mxu0
  %v1835 = vadd.f32 0.0, %v1834
  %v1836 = vpop.f32.mrf.mxu0
  %v1837 = vadd.f32 0.0, %v1836
  %1838 = vmatmul.bf16.gmra.mxu0 %v1241
  %v1839 = vpop.f32.mrf.mxu0
  %v1840 = vadd.f32 0.0, %v1839
  %v1841 = vpop.f32.mrf.mxu0
  %v1842 = vadd.f32 0.0, %v1841
  %1843 = vmatmul.bf16.gmra.mxu0 %v1244
  %v1844 = vpop.f32.mrf.mxu0
  %v1845 = vadd.f32 0.0, %v1844
  %v1846 = vpop.f32.mrf.mxu0
  %v1847 = vadd.f32 0.0, %v1846
  %1848 = vmatmul.bf16.gmra.mxu0 %v1247
  %v1849 = vpop.f32.mrf.mxu0
  %v1850 = vadd.f32 0.0, %v1849
  %v1851 = vpop.f32.mrf.mxu0
  %v1852 = vadd.f32 0.0, %v1851
  %1853 = vmatmul.bf16.gmra.mxu0 %v1250
  %v1854 = vpop.f32.mrf.mxu0
  %v1855 = vadd.f32 0.0, %v1854
  %v1856 = vpop.f32.mrf.mxu0
  %v1857 = vadd.f32 0.0, %v1856
  %1858 = vmatmul.bf16.gmra.mxu0 %v1253
  %v1859 = vpop.f32.mrf.mxu0
  %v1860 = vadd.f32 0.0, %v1859
  %v1861 = vpop.f32.mrf.mxu0
  %v1862 = vadd.f32 0.0, %v1861
  %1863 = vmatmul.bf16.gmra.mxu0 %v1256
  %v1864 = vpop.f32.mrf.mxu0
  %v1865 = vadd.f32 0.0, %v1864
  %v1866 = vpop.f32.mrf.mxu0
  %v1867 = vadd.f32 0.0, %v1866
  %1868 = vmatmul.bf16.gmra.mxu0 %v1259
  %v1869 = vpop.f32.mrf.mxu0
  %v1870 = vadd.f32 0.0, %v1869
  %v1871 = vpop.f32.mrf.mxu0
  %v1872 = vadd.f32 0.0, %v1871
  %1873 = vmatmul.bf16.gmra.mxu0 %v1262
  %v1874 = vpop.f32.mrf.mxu0
  %v1875 = vadd.f32 0.0, %v1874
  %v1876 = vpop.f32.mrf.mxu0
  %v1877 = vadd.f32 0.0, %v1876
  %1878 = vmatmul.bf16.gmra.mxu0 %v1265
  %v1879 = vpop.f32.mrf.mxu0
  %v1880 = vadd.f32 0.0, %v1879
  %v1881 = vpop.f32.mrf.mxu0
  %v1882 = vadd.f32 0.0, %v1881
  %1883 = vmatmul.bf16.gmra.mxu0 %v1268
  %v1884 = vpop.f32.mrf.mxu0
  %v1885 = vadd.f32 0.0, %v1884
  %v1886 = vpop.f32.mrf.mxu0
  %v1887 = vadd.f32 0.0, %v1886
  %1888 = vmatmul.bf16.gmra.mxu0 %v1271
  %v1889 = vpop.f32.mrf.mxu0
  %v1890 = vadd.f32 0.0, %v1889
  %v1891 = vpop.f32.mrf.mxu0
  %v1892 = vadd.f32 0.0, %v1891
  %1893 = vmatmul.bf16.gmra.mxu0 %v1274
  %v1894 = vpop.f32.mrf.mxu0
  %v1895 = vadd.f32 0.0, %v1894
  %v1896 = vpop.f32.mrf.mxu0
  %v1897 = vadd.f32 0.0, %v1896
  %1898 = vmatmul.bf16.gmra.mxu0 %v1277
  %v1899 = vpop.f32.mrf.mxu0
  %v1900 = vadd.f32 0.0, %v1899
  %v1901 = vpop.f32.mrf.mxu0
  %v1902 = vadd.f32 0.0, %v1901
  %1903 = vmatmul.bf16.gmra.mxu0 %v1280
  %v1904 = vpop.f32.mrf.mxu0
  %v1905 = vadd.f32 0.0, %v1904
  %v1906 = vpop.f32.mrf.mxu0
  %v1907 = vadd.f32 0.0, %v1906
  %1908 = vmatmul.bf16.gmra.mxu0 %v1283
  %v1909 = vpop.f32.mrf.mxu0
  %v1910 = vadd.f32 0.0, %v1909
  %v1911 = vpop.f32.mrf.mxu0
  %v1912 = vadd.f32 0.0, %v1911
  %1913 = vmatmul.bf16.gmra.mxu0 %v1286
  %v1914 = vpop.f32.mrf.mxu0
  %v1915 = vadd.f32 0.0, %v1914
  %v1916 = vpop.f32.mrf.mxu0
  %v1917 = vadd.f32 0.0, %v1916
  %1918 = vmatmul.bf16.gmra.mxu0 %v1289
  %v1919 = vpop.f32.mrf.mxu0
  %v1920 = vadd.f32 0.0, %v1919
  %v1921 = vpop.f32.mrf.mxu0
  %v1922 = vadd.f32 0.0, %v1921
  %1923 = vmatmul.bf16.gmra.mxu0 %v1292
  %v1924 = vpop.f32.mrf.mxu0
  %v1925 = vadd.f32 0.0, %v1924
  %v1926 = vpop.f32.mrf.mxu0
  %v1927 = vadd.f32 0.0, %v1926
  %1928 = vmatmul.bf16.gmra.mxu0 %v1295
  %v1929 = vpop.f32.mrf.mxu0
  %v1930 = vadd.f32 0.0, %v1929
  %v1931 = vpop.f32.mrf.mxu0
  %v1932 = vadd.f32 0.0, %v1931
  %1933 = vmatmul.bf16.gmra.mxu0 %v1298
  %v1934 = vpop.f32.mrf.mxu0
  %v1935 = vadd.f32 0.0, %v1934
  %v1936 = vpop.f32.mrf.mxu0
  %v1937 = vadd.f32 0.0, %v1936
  %1938 = vmatmul.bf16.gmra.mxu0 %v1301
  %v1939 = vpop.f32.mrf.mxu0
  %v1940 = vadd.f32 0.0, %v1939
  %v1941 = vpop.f32.mrf.mxu0
  %v1942 = vadd.f32 0.0, %v1941
  %1943 = vmatmul.bf16.gmra.mxu0 %v1304
  %v1944 = vpop.f32.mrf.mxu0
  %v1945 = vadd.f32 0.0, %v1944
  %v1946 = vpop.f32.mrf.mxu0
  %v1947 = vadd.f32 0.0, %v1946
  %1948 = vmatmul.bf16.gmra.mxu0 %v1307
  %v1949 = vpop.f32.mrf.mxu0
  %v1950 = vadd.f32 0.0, %v1949
  %v1951 = vpop.f32.mrf.mxu0
  %v1952 = vadd.f32 0.0, %v1951
  %1953 = vmatmul.bf16.gmra.mxu0 %v1310
  %v1954 = vpop.f32.mrf.mxu0
  %v1955 = vadd.f32 0.0, %v1954
  %v1956 = vpop.f32.mrf.mxu0
  %v1957 = vadd.f32 0.0, %v1956
  %1958 = vmatmul.bf16.gmra.mxu0 %v1313
  %v1959 = vpop.f32.mrf.mxu0
  %v1960 = vadd.f32 0.0, %v1959
  %v1961 = vpop.f32.mrf.mxu0
  %v1962 = vadd.f32 0.0, %v1961
  %1963 = vdwg.mxu0
  %v1964 = vmax.f32 %v1325, 0.0
  %v1965 = vmax.f32 %v1327, 0.0
  %v1966 = vmax.f32 %v1330, 0.0
  %v1967 = vmax.f32 %v1332, 0.0
  %v1968 = vmax.f32 %v1335, 0.0
  %v1969 = vmax.f32 %v1337, 0.0
  %v1970 = vmax.f32 %v1340, 0.0
  %v1971 = vmax.f32 %v1342, 0.0
  %v1972 = vmax.f32 %v1345, 0.0
  %v1973 = vmax.f32 %v1347, 0.0
  %v1974 = vmax.f32 %v1350, 0.0
  %v1975 = vmax.f32 %v1352, 0.0
  %v1976 = vmax.f32 %v1355, 0.0
  %v1977 = vmax.f32 %v1357, 0.0
  %v1978 = vmax.f32 %v1360, 0.0
  %v1979 = vmax.f32 %v1362, 0.0
  %v1980 = vmax.f32 %v1365, 0.0
  %v1981 = vmax.f32 %v1367, 0.0
  %v1982 = vmax.f32 %v1370, 0.0
  %v1983 = vmax.f32 %v1372, 0.0
  %v1984 = vmax.f32 %v1375, 0.0
  %v1985 = vmax.f32 %v1377, 0.0
  %v1986 = vmax.f32 %v1380, 0.0
  %v1987 = vmax.f32 %v1382, 0.0
  %v1988 = vmax.f32 %v1385, 0.0
  %v1989 = vmax.f32 %v1387, 0.0
  %v1990 = vmax.f32 %v1390, 0.0
  %v1991 = vmax.f32 %v1392, 0.0
  %v1992 = vmax.f32 %v1395, 0.0
  %v1993 = vmax.f32 %v1397, 0.0
  %v1994 = vmax.f32 %v1400, 0.0
  %v1995 = vmax.f32 %v1402, 0.0
  %v1996 = vmax.f32 %v1405, 0.0
  %v1997 = vmax.f32 %v1407, 0.0
  %v1998 = vmax.f32 %v1410, 0.0
  %v1999 = vmax.f32 %v1412, 0.0
  %v2000 = vmax.f32 %v1415, 0.0
  %v2001 = vmax.f32 %v1417, 0.0
  %v2002 = vmax.f32 %v1420, 0.0
  %v2003 = vmax.f32 %v1422, 0.0
  %v2004 = vmax.f32 %v1425, 0.0
  %v2005 = vmax.f32 %v1427, 0.0
  %v2006 = vmax.f32 %v1430, 0.0
  %v2007 = vmax.f32 %v1432, 0.0
  %v2008 = vmax.f32 %v1435, 0.0
  %v2009 = vmax.f32 %v1437, 0.0
  %v2010 = vmax.f32 %v1440, 0.0
  %v2011 = vmax.f32 %v1442, 0.0
  %v2012 = vmax.f32 %v1445, 0.0
  %v2013 = vmax.f32 %v1447, 0.0
  %v2014 = vmax.f32 %v1450, 0.0
  %v2015 = vmax.f32 %v1452, 0.0
  %v2016 = vmax.f32 %v1455, 0.0
  %v2017 = vmax.f32 %v1457, 0.0
  %v2018 = vmax.f32 %v1460, 0.0
  %v2019 = vmax.f32 %v1462, 0.0
  %v2020 = vmax.f32 %v1465, 0.0
  %v2021 = vmax.f32 %v1467, 0.0
  %v2022 = vmax.f32 %v1470, 0.0
  %v2023 = vmax.f32 %v1472, 0.0
  %v2024 = vmax.f32 %v1475, 0.0
  %v2025 = vmax.f32 %v1477, 0.0
  %v2026 = vmax.f32 %v1480, 0.0
  %v2027 = vmax.f32 %v1482, 0.0
  %v2028 = vmax.f32 %v1485, 0.0
  %v2029 = vmax.f32 %v1487, 0.0
  %v2030 = vmax.f32 %v1490, 0.0
  %v2031 = vmax.f32 %v1492, 0.0
  %v2032 = vmax.f32 %v1495, 0.0
  %v2033 = vmax.f32 %v1497, 0.0
  %v2034 = vmax.f32 %v1500, 0.0
  %v2035 = vmax.f32 %v1502, 0.0
  %v2036 = vmax.f32 %v1505, 0.0
  %v2037 = vmax.f32 %v1507, 0.0
  %v2038 = vmax.f32 %v1510, 0.0
  %v2039 = vmax.f32 %v1512, 0.0
  %v2040 = vmax.f32 %v1515, 0.0
  %v2041 = vmax.f32 %v1517, 0.0
  %v2042 = vmax.f32 %v1520, 0.0
  %v2043 = vmax.f32 %v1522, 0.0
  %v2044 = vmax.f32 %v1525, 0.0
  %v2045 = vmax.f32 %v1527, 0.0
  %v2046 = vmax.f32 %v1530, 0.0
  %v2047 = vmax.f32 %v1532, 0.0
  %v2048 = vmax.f32 %v1535, 0.0
  %v2049 = vmax.f32 %v1537, 0.0
  %v2050 = vmax.f32 %v1540, 0.0
  %v2051 = vmax.f32 %v1542, 0.0
  %v2052 = vmax.f32 %v1545, 0.0
  %v2053 = vmax.f32 %v1547, 0.0
  %v2054 = vmax.f32 %v1550, 0.0
  %v2055 = vmax.f32 %v1552, 0.0
  %v2056 = vmax.f32 %v1555, 0.0
  %v2057 = vmax.f32 %v1557, 0.0
  %v2058 = vmax.f32 %v1560, 0.0
  %v2059 = vmax.f32 %v1562, 0.0
  %v2060 = vmax.f32 %v1565, 0.0
  %v2061 = vmax.f32 %v1567, 0.0
  %v2062 = vmax.f32 %v1570, 0.0
  %v2063 = vmax.f32 %v1572, 0.0
  %v2064 = vmax.f32 %v1575, 0.0
  %v2065 = vmax.f32 %v1577, 0.0
  %v2066 = vmax.f32 %v1580, 0.0
  %v2067 = vmax.f32 %v1582, 0.0
  %v2068 = vmax.f32 %v1585, 0.0
  %v2069 = vmax.f32 %v1587, 0.0
  %v2070 = vmax.f32 %v1590, 0.0
  %v2071 = vmax.f32 %v1592, 0.0
  %v2072 = vmax.f32 %v1595, 0.0
  %v2073 = vmax.f32 %v1597, 0.0
  %v2074 = vmax.f32 %v1600, 0.0
  %v2075 = vmax.f32 %v1602, 0.0
  %v2076 = vmax.f32 %v1605, 0.0
  %v2077 = vmax.f32 %v1607, 0.0
  %v2078 = vmax.f32 %v1610, 0.0
  %v2079 = vmax.f32 %v1612, 0.0
  %v2080 = vmax.f32 %v1615, 0.0
  %v2081 = vmax.f32 %v1617, 0.0
  %v2082 = vmax.f32 %v1620, 0.0
  %v2083 = vmax.f32 %v1622, 0.0
  %v2084 = vmax.f32 %v1625, 0.0
  %v2085 = vmax.f32 %v1627, 0.0
  %v2086 = vmax.f32 %v1630, 0.0
  %v2087 = vmax.f32 %v1632, 0.0
  %v2088 = vmax.f32 %v1635, 0.0
  %v2089 = vmax.f32 %v1637, 0.0
  %v2090 = vmax.f32 %v1640, 0.0
  %v2091 = vmax.f32 %v1642, 0.0
  %v2092 = vmax.f32 %v1645, 0.0
  %v2093 = vmax.f32 %v1647, 0.0
  %v2094 = vmax.f32 %v1650, 0.0
  %v2095 = vmax.f32 %v1652, 0.0
  %v2096 = vmax.f32 %v1655, 0.0
  %v2097 = vmax.f32 %v1657, 0.0
  %v2098 = vmax.f32 %v1660, 0.0
  %v2099 = vmax.f32 %v1662, 0.0
  %v2100 = vmax.f32 %v1665, 0.0
  %v2101 = vmax.f32 %v1667, 0.0
  %v2102 = vmax.f32 %v1670, 0.0
  %v2103 = vmax.f32 %v1672, 0.0
  %v2104 = vmax.f32 %v1675, 0.0
  %v2105 = vmax.f32 %v1677, 0.0
  %v2106 = vmax.f32 %v1680, 0.0
  %v2107 = vmax.f32 %v1682, 0.0
  %v2108 = vmax.f32 %v1685, 0.0
  %v2109 = vmax.f32 %v1687, 0.0
  %v2110 = vmax.f32 %v1690, 0.0
  %v2111 = vmax.f32 %v1692, 0.0
  %v2112 = vmax.f32 %v1695, 0.0
  %v2113 = vmax.f32 %v1697, 0.0
  %v2114 = vmax.f32 %v1700, 0.0
  %v2115 = vmax.f32 %v1702, 0.0
  %v2116 = vmax.f32 %v1705, 0.0
  %v2117 = vmax.f32 %v1707, 0.0
  %v2118 = vmax.f32 %v1710, 0.0
  %v2119 = vmax.f32 %v1712, 0.0
  %v2120 = vmax.f32 %v1715, 0.0
  %v2121 = vmax.f32 %v1717, 0.0
  %v2122 = vmax.f32 %v1720, 0.0
  %v2123 = vmax.f32 %v1722, 0.0
  %v2124 = vmax.f32 %v1725, 0.0
  %v2125 = vmax.f32 %v1727, 0.0
  %v2126 = vmax.f32 %v1730, 0.0
  %v2127 = vmax.f32 %v1732, 0.0
  %v2128 = vmax.f32 %v1735, 0.0
  %v2129 = vmax.f32 %v1737, 0.0
  %v2130 = vmax.f32 %v1740, 0.0
  %v2131 = vmax.f32 %v1742, 0.0
  %v2132 = vmax.f32 %v1745, 0.0
  %v2133 = vmax.f32 %v1747, 0.0
  %v2134 = vmax.f32 %v1750, 0.0
  %v2135 = vmax.f32 %v1752, 0.0
  %v2136 = vmax.f32 %v1755, 0.0
  %v2137 = vmax.f32 %v1757, 0.0
  %v2138 = vmax.f32 %v1760, 0.0
  %v2139 = vmax.f32 %v1762, 0.0
  %v2140 = vmax.f32 %v1765, 0.0
  %v2141 = vmax.f32 %v1767, 0.0
  %v2142 = vmax.f32 %v1770, 0.0
  %v2143 = vmax.f32 %v1772, 0.0
  %v2144 = vmax.f32 %v1775, 0.0
  %v2145 = vmax.f32 %v1777, 0.0
  %v2146 = vmax.f32 %v1780, 0.0
  %v2147 = vmax.f32 %v1782, 0.0
  %v2148 = vmax.f32 %v1785, 0.0
  %v2149 = vmax.f32 %v1787, 0.0
  %v2150 = vmax.f32 %v1790, 0.0
  %v2151 = vmax.f32 %v1792, 0.0
  %v2152 = vmax.f32 %v1795, 0.0
  %v2153 = vmax.f32 %v1797, 0.0
  %v2154 = vmax.f32 %v1800, 0.0
  %v2155 = vmax.f32 %v1802, 0.0
  %v2156 = vmax.f32 %v1805, 0.0
  %v2157 = vmax.f32 %v1807, 0.0
  %v2158 = vmax.f32 %v1810, 0.0
  %v2159 = vmax.f32 %v1812, 0.0
  %v2160 = vmax.f32 %v1815, 0.0
  %v2161 = vmax.f32 %v1817, 0.0
  %v2162 = vmax.f32 %v1820, 0.0
  %v2163 = vmax.f32 %v1822, 0.0
  %v2164 = vmax.f32 %v1825, 0.0
  %v2165 = vmax.f32 %v1827, 0.0
  %v2166 = vmax.f32 %v1830, 0.0
  %v2167 = vmax.f32 %v1832, 0.0
  %v2168 = vmax.f32 %v1835, 0.0
  %v2169 = vmax.f32 %v1837, 0.0
  %v2170 = vmax.f32 %v1840, 0.0
  %v2171 = vmax.f32 %v1842, 0.0
  %v2172 = vmax.f32 %v1845, 0.0
  %v2173 = vmax.f32 %v1847, 0.0
  %v2174 = vmax.f32 %v1850, 0.0
  %v2175 = vmax.f32 %v1852, 0.0
  %v2176 = vmax.f32 %v1855, 0.0
  %v2177 = vmax.f32 %v1857, 0.0
  %v2178 = vmax.f32 %v1860, 0.0
  %v2179 = vmax.f32 %v1862, 0.0
  %v2180 = vmax.f32 %v1865, 0.0
  %v2181 = vmax.f32 %v1867, 0.0
  %v2182 = vmax.f32 %v1870, 0.0
  %v2183 = vmax.f32 %v1872, 0.0
  %v2184 = vmax.f32 %v1875, 0.0
  %v2185 = vmax.f32 %v1877, 0.0
  %v2186 = vmax.f32 %v1880, 0.0
  %v2187 = vmax.f32 %v1882, 0.0
  %v2188 = vmax.f32 %v1885, 0.0
  %v2189 = vmax.f32 %v1887, 0.0
  %v2190 = vmax.f32 %v1890, 0.0
  %v2191 = vmax.f32 %v1892, 0.0
  %v2192 = vmax.f32 %v1895, 0.0
  %v2193 = vmax.f32 %v1897, 0.0
  %v2194 = vmax.f32 %v1900, 0.0
  %v2195 = vmax.f32 %v1902, 0.0
  %v2196 = vmax.f32 %v1905, 0.0
  %v2197 = vmax.f32 %v1907, 0.0
  %v2198 = vmax.f32 %v1910, 0.0
  %v2199 = vmax.f32 %v1912, 0.0
  %v2200 = vmax.f32 %v1915, 0.0
  %v2201 = vmax.f32 %v1917, 0.0
  %v2202 = vmax.f32 %v1920, 0.0
  %v2203 = vmax.f32 %v1922, 0.0
  %v2204 = vmax.f32 %v1925, 0.0
  %v2205 = vmax.f32 %v1927, 0.0
  %v2206 = vmax.f32 %v1930, 0.0
  %v2207 = vmax.f32 %v1932, 0.0
  %v2208 = vmax.f32 %v1935, 0.0
  %v2209 = vmax.f32 %v1937, 0.0
  %v2210 = vmax.f32 %v1940, 0.0
  %v2211 = vmax.f32 %v1942, 0.0
  %v2212 = vmax.f32 %v1945, 0.0
  %v2213 = vmax.f32 %v1947, 0.0
  %v2214 = vmax.f32 %v1950, 0.0
  %v2215 = vmax.f32 %v1952, 0.0
  %v2216 = vmax.f32 %v1955, 0.0
  %v2217 = vmax.f32 %v1957, 0.0
  %v2218 = vmax.f32 %v1960, 0.0
  %v2219 = vmax.f32 %v1962, 0.0
  %v2220 = vsel %vm930, %v1964, 0.0
  %v2221 = vsel %vm930, %v1965, 0.0
  %v2222 = vadd.f32 %v2220, %v2221
  %v2223 = vsel %vm930, %v1966, 0.0
  %v2224 = vadd.f32 %v2222, %v2223
  %v2225 = vsel %vm930, %v1967, 0.0
  %v2226 = vadd.f32 %v2224, %v2225
  %v2227 = vsel %vm930, %v1968, 0.0
  %v2228 = vadd.f32 %v2226, %v2227
  %v2229 = vsel %vm930, %v1969, 0.0
  %v2230 = vadd.f32 %v2228, %v2229
  %v2231 = vsel %vm930, %v1970, 0.0
  %v2232 = vadd.f32 %v2230, %v2231
  %v2233 = vsel %vm930, %v1971, 0.0
  %v2234 = vadd.f32 %v2232, %v2233
  %v2235 = vsel %vm930, %v1972, 0.0
  %v2236 = vadd.f32 %v2234, %v2235
  %v2237 = vsel %vm930, %v1973, 0.0
  %v2238 = vadd.f32 %v2236, %v2237
  %v2239 = vsel %vm930, %v1974, 0.0
  %v2240 = vadd.f32 %v2238, %v2239
  %v2241 = vsel %vm930, %v1975, 0.0
  %v2242 = vadd.f32 %v2240, %v2241
  %v2243 = vsel %vm930, %v1976, 0.0
  %v2244 = vadd.f32 %v2242, %v2243
  %v2245 = vsel %vm930, %v1977, 0.0
  %v2246 = vadd.f32 %v2244, %v2245
  %v2247 = vsel %vm930, %v1978, 0.0
  %v2248 = vadd.f32 %v2246, %v2247
  %v2249 = vsel %vm930, %v1979, 0.0
  %v2250 = vadd.f32 %v2248, %v2249
  %v2251 = vsel %vm930, %v1980, 0.0
  %v2252 = vadd.f32 %v2250, %v2251
  %v2253 = vsel %vm930, %v1981, 0.0
  %v2254 = vadd.f32 %v2252, %v2253
  %v2255 = vsel %vm930, %v1982, 0.0
  %v2256 = vadd.f32 %v2254, %v2255
  %v2257 = vsel %vm930, %v1983, 0.0
  %v2258 = vadd.f32 %v2256, %v2257
  %v2259 = vsel %vm930, %v1984, 0.0
  %v2260 = vadd.f32 %v2258, %v2259
  %v2261 = vsel %vm930, %v1985, 0.0
  %v2262 = vadd.f32 %v2260, %v2261
  %v2263 = vsel %vm930, %v1986, 0.0
  %v2264 = vadd.f32 %v2262, %v2263
  %v2265 = vsel %vm930, %v1987, 0.0
  %v2266 = vadd.f32 %v2264, %v2265
  %v2267 = vsel %vm930, %v1988, 0.0
  %v2268 = vadd.f32 %v2266, %v2267
  %v2269 = vsel %vm930, %v1989, 0.0
  %v2270 = vadd.f32 %v2268, %v2269
  %v2271 = vsel %vm930, %v1990, 0.0
  %v2272 = vadd.f32 %v2270, %v2271
  %v2273 = vsel %vm930, %v1991, 0.0
  %v2274 = vadd.f32 %v2272, %v2273
  %v2275 = vsel %vm930, %v1992, 0.0
  %v2276 = vadd.f32 %v2274, %v2275
  %v2277 = vsel %vm930, %v1993, 0.0
  %v2278 = vadd.f32 %v2276, %v2277
  %v2279 = vsel %vm930, %v1994, 0.0
  %v2280 = vadd.f32 %v2278, %v2279
  %v2281 = vsel %vm930, %v1995, 0.0
  %v2282 = vadd.f32 %v2280, %v2281
  %v2283 = vrot.slane %v2282, 4
  %v2284 = vadd.f32 %v2282, %v2283
  %v2285 = vrot.slane %v2284, 2
  %v2286 = vadd.f32 %v2284, %v2285
  %v2287 = vrot.slane %v2286, 1
  %v2288 = vadd.f32 %v2286, %v2287
  %v2289 = vsel %vm930, %v1996, 0.0
  %v2290 = vsel %vm930, %v1997, 0.0
  %v2291 = vadd.f32 %v2289, %v2290
  %v2292 = vsel %vm930, %v1998, 0.0
  %v2293 = vadd.f32 %v2291, %v2292
  %v2294 = vsel %vm930, %v1999, 0.0
  %v2295 = vadd.f32 %v2293, %v2294
  %v2296 = vsel %vm930, %v2000, 0.0
  %v2297 = vadd.f32 %v2295, %v2296
  %v2298 = vsel %vm930, %v2001, 0.0
  %v2299 = vadd.f32 %v2297, %v2298
  %v2300 = vsel %vm930, %v2002, 0.0
  %v2301 = vadd.f32 %v2299, %v2300
  %v2302 = vsel %vm930, %v2003, 0.0
  %v2303 = vadd.f32 %v2301, %v2302
  %v2304 = vsel %vm930, %v2004, 0.0
  %v2305 = vadd.f32 %v2303, %v2304
  %v2306 = vsel %vm930, %v2005, 0.0
  %v2307 = vadd.f32 %v2305, %v2306
  %v2308 = vsel %vm930, %v2006, 0.0
  %v2309 = vadd.f32 %v2307, %v2308
  %v2310 = vsel %vm930, %v2007, 0.0
  %v2311 = vadd.f32 %v2309, %v2310
  %v2312 = vsel %vm930, %v2008, 0.0
  %v2313 = vadd.f32 %v2311, %v2312
  %v2314 = vsel %vm930, %v2009, 0.0
  %v2315 = vadd.f32 %v2313, %v2314
  %v2316 = vsel %vm930, %v2010, 0.0
  %v2317 = vadd.f32 %v2315, %v2316
  %v2318 = vsel %vm930, %v2011, 0.0
  %v2319 = vadd.f32 %v2317, %v2318
  %v2320 = vsel %vm930, %v2012, 0.0
  %v2321 = vadd.f32 %v2319, %v2320
  %v2322 = vsel %vm930, %v2013, 0.0
  %v2323 = vadd.f32 %v2321, %v2322
  %v2324 = vsel %vm930, %v2014, 0.0
  %v2325 = vadd.f32 %v2323, %v2324
  %v2326 = vsel %vm930, %v2015, 0.0
  %v2327 = vadd.f32 %v2325, %v2326
  %v2328 = vsel %vm930, %v2016, 0.0
  %v2329 = vadd.f32 %v2327, %v2328
  %v2330 = vsel %vm930, %v2017, 0.0
  %v2331 = vadd.f32 %v2329, %v2330
  %v2332 = vsel %vm930, %v2018, 0.0
  %v2333 = vadd.f32 %v2331, %v2332
  %v2334 = vsel %vm930, %v2019, 0.0
  %v2335 = vadd.f32 %v2333, %v2334
  %v2336 = vsel %vm930, %v2020, 0.0
  %v2337 = vadd.f32 %v2335, %v2336
  %v2338 = vsel %vm930, %v2021, 0.0
  %v2339 = vadd.f32 %v2337, %v2338
  %v2340 = vsel %vm930, %v2022, 0.0
  %v2341 = vadd.f32 %v2339, %v2340
  %v2342 = vsel %vm930, %v2023, 0.0
  %v2343 = vadd.f32 %v2341, %v2342
  %v2344 = vsel %vm930, %v2024, 0.0
  %v2345 = vadd.f32 %v2343, %v2344
  %v2346 = vsel %vm930, %v2025, 0.0
  %v2347 = vadd.f32 %v2345, %v2346
  %v2348 = vsel %vm930, %v2026, 0.0
  %v2349 = vadd.f32 %v2347, %v2348
  %v2350 = vsel %vm930, %v2027, 0.0
  %v2351 = vadd.f32 %v2349, %v2350
  %v2352 = vrot.slane %v2351, 4
  %v2353 = vadd.f32 %v2351, %v2352
  %v2354 = vrot.slane %v2353, 2
  %v2355 = vadd.f32 %v2353, %v2354
  %v2356 = vrot.slane %v2355, 1
  %v2357 = vadd.f32 %v2355, %v2356
  %v2358 = vsel %vm930, %v2028, 0.0
  %v2359 = vsel %vm930, %v2029, 0.0
  %v2360 = vadd.f32 %v2358, %v2359
  %v2361 = vsel %vm930, %v2030, 0.0
  %v2362 = vadd.f32 %v2360, %v2361
  %v2363 = vsel %vm930, %v2031, 0.0
  %v2364 = vadd.f32 %v2362, %v2363
  %v2365 = vsel %vm930, %v2032, 0.0
  %v2366 = vadd.f32 %v2364, %v2365
  %v2367 = vsel %vm930, %v2033, 0.0
  %v2368 = vadd.f32 %v2366, %v2367
  %v2369 = vsel %vm930, %v2034, 0.0
  %v2370 = vadd.f32 %v2368, %v2369
  %v2371 = vsel %vm930, %v2035, 0.0
  %v2372 = vadd.f32 %v2370, %v2371
  %v2373 = vsel %vm930, %v2036, 0.0
  %v2374 = vadd.f32 %v2372, %v2373
  %v2375 = vsel %vm930, %v2037, 0.0
  %v2376 = vadd.f32 %v2374, %v2375
  %v2377 = vsel %vm930, %v2038, 0.0
  %v2378 = vadd.f32 %v2376, %v2377
  %v2379 = vsel %vm930, %v2039, 0.0
  %v2380 = vadd.f32 %v2378, %v2379
  %v2381 = vsel %vm930, %v2040, 0.0
  %v2382 = vadd.f32 %v2380, %v2381
  %v2383 = vsel %vm930, %v2041, 0.0
  %v2384 = vadd.f32 %v2382, %v2383
  %v2385 = vsel %vm930, %v2042, 0.0
  %v2386 = vadd.f32 %v2384, %v2385
  %v2387 = vsel %vm930, %v2043, 0.0
  %v2388 = vadd.f32 %v2386, %v2387
  %v2389 = vsel %vm930, %v2044, 0.0
  %v2390 = vadd.f32 %v2388, %v2389
  %v2391 = vsel %vm930, %v2045, 0.0
  %v2392 = vadd.f32 %v2390, %v2391
  %v2393 = vsel %vm930, %v2046, 0.0
  %v2394 = vadd.f32 %v2392, %v2393
  %v2395 = vsel %vm930, %v2047, 0.0
  %v2396 = vadd.f32 %v2394, %v2395
  %v2397 = vsel %vm930, %v2048, 0.0
  %v2398 = vadd.f32 %v2396, %v2397
  %v2399 = vsel %vm930, %v2049, 0.0
  %v2400 = vadd.f32 %v2398, %v2399
  %v2401 = vsel %vm930, %v2050, 0.0
  %v2402 = vadd.f32 %v2400, %v2401
  %v2403 = vsel %vm930, %v2051, 0.0
  %v2404 = vadd.f32 %v2402, %v2403
  %v2405 = vsel %vm930, %v2052, 0.0
  %v2406 = vadd.f32 %v2404, %v2405
  %v2407 = vsel %vm930, %v2053, 0.0
  %v2408 = vadd.f32 %v2406, %v2407
  %v2409 = vsel %vm930, %v2054, 0.0
  %v2410 = vadd.f32 %v2408, %v2409
  %v2411 = vsel %vm930, %v2055, 0.0
  %v2412 = vadd.f32 %v2410, %v2411
  %v2413 = vsel %vm930, %v2056, 0.0
  %v2414 = vadd.f32 %v2412, %v2413
  %v2415 = vsel %vm930, %v2057, 0.0
  %v2416 = vadd.f32 %v2414, %v2415
  %v2417 = vsel %vm930, %v2058, 0.0
  %v2418 = vadd.f32 %v2416, %v2417
  %v2419 = vsel %vm930, %v2059, 0.0
  %v2420 = vadd.f32 %v2418, %v2419
  %v2421 = vrot.slane %v2420, 4
  %v2422 = vadd.f32 %v2420, %v2421
  %v2423 = vrot.slane %v2422, 2
  %v2424 = vadd.f32 %v2422, %v2423
  %v2425 = vrot.slane %v2424, 1
  %v2426 = vadd.f32 %v2424, %v2425
  %v2427 = vsel %vm930, %v2060, 0.0
  %v2428 = vsel %vm930, %v2061, 0.0
  %v2429 = vadd.f32 %v2427, %v2428
  %v2430 = vsel %vm930, %v2062, 0.0
  %v2431 = vadd.f32 %v2429, %v2430
  %v2432 = vsel %vm930, %v2063, 0.0
  %v2433 = vadd.f32 %v2431, %v2432
  %v2434 = vsel %vm930, %v2064, 0.0
  %v2435 = vadd.f32 %v2433, %v2434
  %v2436 = vsel %vm930, %v2065, 0.0
  %v2437 = vadd.f32 %v2435, %v2436
  %v2438 = vsel %vm930, %v2066, 0.0
  %v2439 = vadd.f32 %v2437, %v2438
  %v2440 = vsel %vm930, %v2067, 0.0
  %v2441 = vadd.f32 %v2439, %v2440
  %v2442 = vsel %vm930, %v2068, 0.0
  %v2443 = vadd.f32 %v2441, %v2442
  %v2444 = vsel %vm930, %v2069, 0.0
  %v2445 = vadd.f32 %v2443, %v2444
  %v2446 = vsel %vm930, %v2070, 0.0
  %v2447 = vadd.f32 %v2445, %v2446
  %v2448 = vsel %vm930, %v2071, 0.0
  %v2449 = vadd.f32 %v2447, %v2448
  %v2450 = vsel %vm930, %v2072, 0.0
  %v2451 = vadd.f32 %v2449, %v2450
  %v2452 = vsel %vm930, %v2073, 0.0
  %v2453 = vadd.f32 %v2451, %v2452
  %v2454 = vsel %vm930, %v2074, 0.0
  %v2455 = vadd.f32 %v2453, %v2454
  %v2456 = vsel %vm930, %v2075, 0.0
  %v2457 = vadd.f32 %v2455, %v2456
  %v2458 = vsel %vm930, %v2076, 0.0
  %v2459 = vadd.f32 %v2457, %v2458
  %v2460 = vsel %vm930, %v2077, 0.0
  %v2461 = vadd.f32 %v2459, %v2460
  %v2462 = vsel %vm930, %v2078, 0.0
  %v2463 = vadd.f32 %v2461, %v2462
  %v2464 = vsel %vm930, %v2079, 0.0
  %v2465 = vadd.f32 %v2463, %v2464
  %v2466 = vsel %vm930, %v2080, 0.0
  %v2467 = vadd.f32 %v2465, %v2466
  %v2468 = vsel %vm930, %v2081, 0.0
  %v2469 = vadd.f32 %v2467, %v2468
  %v2470 = vsel %vm930, %v2082, 0.0
  %v2471 = vadd.f32 %v2469, %v2470
  %v2472 = vsel %vm930, %v2083, 0.0
  %v2473 = vadd.f32 %v2471, %v2472
  %v2474 = vsel %vm930, %v2084, 0.0
  %v2475 = vadd.f32 %v2473, %v2474
  %v2476 = vsel %vm930, %v2085, 0.0
  %v2477 = vadd.f32 %v2475, %v2476
  %v2478 = vsel %vm930, %v2086, 0.0
  %v2479 = vadd.f32 %v2477, %v2478
  %v2480 = vsel %vm930, %v2087, 0.0
  %v2481 = vadd.f32 %v2479, %v2480
  %v2482 = vsel %vm930, %v2088, 0.0
  %v2483 = vadd.f32 %v2481, %v2482
  %v2484 = vsel %vm930, %v2089, 0.0
  %v2485 = vadd.f32 %v2483, %v2484
  %v2486 = vsel %vm930, %v2090, 0.0
  %v2487 = vadd.f32 %v2485, %v2486
  %v2488 = vsel %vm930, %v2091, 0.0
  %v2489 = vadd.f32 %v2487, %v2488
  %v2490 = vrot.slane %v2489, 4
  %v2491 = vadd.f32 %v2489, %v2490
  %v2492 = vrot.slane %v2491, 2
  %v2493 = vadd.f32 %v2491, %v2492
  %v2494 = vrot.slane %v2493, 1
  %v2495 = vadd.f32 %v2493, %v2494
  %v2496 = vsel %vm930, %v2092, 0.0
  %v2497 = vsel %vm930, %v2093, 0.0
  %v2498 = vadd.f32 %v2496, %v2497
  %v2499 = vsel %vm930, %v2094, 0.0
  %v2500 = vadd.f32 %v2498, %v2499
  %v2501 = vsel %vm930, %v2095, 0.0
  %v2502 = vadd.f32 %v2500, %v2501
  %v2503 = vsel %vm930, %v2096, 0.0
  %v2504 = vadd.f32 %v2502, %v2503
  %v2505 = vsel %vm930, %v2097, 0.0
  %v2506 = vadd.f32 %v2504, %v2505
  %v2507 = vsel %vm930, %v2098, 0.0
  %v2508 = vadd.f32 %v2506, %v2507
  %v2509 = vsel %vm930, %v2099, 0.0
  %v2510 = vadd.f32 %v2508, %v2509
  %v2511 = vsel %vm930, %v2100, 0.0
  %v2512 = vadd.f32 %v2510, %v2511
  %v2513 = vsel %vm930, %v2101, 0.0
  %v2514 = vadd.f32 %v2512, %v2513
  %v2515 = vsel %vm930, %v2102, 0.0
  %v2516 = vadd.f32 %v2514, %v2515
  %v2517 = vsel %vm930, %v2103, 0.0
  %v2518 = vadd.f32 %v2516, %v2517
  %v2519 = vsel %vm930, %v2104, 0.0
  %v2520 = vadd.f32 %v2518, %v2519
  %v2521 = vsel %vm930, %v2105, 0.0
  %v2522 = vadd.f32 %v2520, %v2521
  %v2523 = vsel %vm930, %v2106, 0.0
  %v2524 = vadd.f32 %v2522, %v2523
  %v2525 = vsel %vm930, %v2107, 0.0
  %v2526 = vadd.f32 %v2524, %v2525
  %v2527 = vsel %vm930, %v2108, 0.0
  %v2528 = vadd.f32 %v2526, %v2527
  %v2529 = vsel %vm930, %v2109, 0.0
  %v2530 = vadd.f32 %v2528, %v2529
  %v2531 = vsel %vm930, %v2110, 0.0
  %v2532 = vadd.f32 %v2530, %v2531
  %v2533 = vsel %vm930, %v2111, 0.0
  %v2534 = vadd.f32 %v2532, %v2533
  %v2535 = vsel %vm930, %v2112, 0.0
  %v2536 = vadd.f32 %v2534, %v2535
  %v2537 = vsel %vm930, %v2113, 0.0
  %v2538 = vadd.f32 %v2536, %v2537
  %v2539 = vsel %vm930, %v2114, 0.0
  %v2540 = vadd.f32 %v2538, %v2539
  %v2541 = vsel %vm930, %v2115, 0.0
  %v2542 = vadd.f32 %v2540, %v2541
  %v2543 = vsel %vm930, %v2116, 0.0
  %v2544 = vadd.f32 %v2542, %v2543
  %v2545 = vsel %vm930, %v2117, 0.0
  %v2546 = vadd.f32 %v2544, %v2545
  %v2547 = vsel %vm930, %v2118, 0.0
  %v2548 = vadd.f32 %v2546, %v2547
  %v2549 = vsel %vm930, %v2119, 0.0
  %v2550 = vadd.f32 %v2548, %v2549
  %v2551 = vsel %vm930, %v2120, 0.0
  %v2552 = vadd.f32 %v2550, %v2551
  %v2553 = vsel %vm930, %v2121, 0.0
  %v2554 = vadd.f32 %v2552, %v2553
  %v2555 = vsel %vm930, %v2122, 0.0
  %v2556 = vadd.f32 %v2554, %v2555
  %v2557 = vsel %vm930, %v2123, 0.0
  %v2558 = vadd.f32 %v2556, %v2557
  %v2559 = vrot.slane %v2558, 4
  %v2560 = vadd.f32 %v2558, %v2559
  %v2561 = vrot.slane %v2560, 2
  %v2562 = vadd.f32 %v2560, %v2561
  %v2563 = vrot.slane %v2562, 1
  %v2564 = vadd.f32 %v2562, %v2563
  %v2565 = vsel %vm930, %v2124, 0.0
  %v2566 = vsel %vm930, %v2125, 0.0
  %v2567 = vadd.f32 %v2565, %v2566
  %v2568 = vsel %vm930, %v2126, 0.0
  %v2569 = vadd.f32 %v2567, %v2568
  %v2570 = vsel %vm930, %v2127, 0.0
  %v2571 = vadd.f32 %v2569, %v2570
  %v2572 = vsel %vm930, %v2128, 0.0
  %v2573 = vadd.f32 %v2571, %v2572
  %v2574 = vsel %vm930, %v2129, 0.0
  %v2575 = vadd.f32 %v2573, %v2574
  %v2576 = vsel %vm930, %v2130, 0.0
  %v2577 = vadd.f32 %v2575, %v2576
  %v2578 = vsel %vm930, %v2131, 0.0
  %v2579 = vadd.f32 %v2577, %v2578
  %v2580 = vsel %vm930, %v2132, 0.0
  %v2581 = vadd.f32 %v2579, %v2580
  %v2582 = vsel %vm930, %v2133, 0.0
  %v2583 = vadd.f32 %v2581, %v2582
  %v2584 = vsel %vm930, %v2134, 0.0
  %v2585 = vadd.f32 %v2583, %v2584
  %v2586 = vsel %vm930, %v2135, 0.0
  %v2587 = vadd.f32 %v2585, %v2586
  %v2588 = vsel %vm930, %v2136, 0.0
  %v2589 = vadd.f32 %v2587, %v2588
  %v2590 = vsel %vm930, %v2137, 0.0
  %v2591 = vadd.f32 %v2589, %v2590
  %v2592 = vsel %vm930, %v2138, 0.0
  %v2593 = vadd.f32 %v2591, %v2592
  %v2594 = vsel %vm930, %v2139, 0.0
  %v2595 = vadd.f32 %v2593, %v2594
  %v2596 = vsel %vm930, %v2140, 0.0
  %v2597 = vadd.f32 %v2595, %v2596
  %v2598 = vsel %vm930, %v2141, 0.0
  %v2599 = vadd.f32 %v2597, %v2598
  %v2600 = vsel %vm930, %v2142, 0.0
  %v2601 = vadd.f32 %v2599, %v2600
  %v2602 = vsel %vm930, %v2143, 0.0
  %v2603 = vadd.f32 %v2601, %v2602
  %v2604 = vsel %vm930, %v2144, 0.0
  %v2605 = vadd.f32 %v2603, %v2604
  %v2606 = vsel %vm930, %v2145, 0.0
  %v2607 = vadd.f32 %v2605, %v2606
  %v2608 = vsel %vm930, %v2146, 0.0
  %v2609 = vadd.f32 %v2607, %v2608
  %v2610 = vsel %vm930, %v2147, 0.0
  %v2611 = vadd.f32 %v2609, %v2610
  %v2612 = vsel %vm930, %v2148, 0.0
  %v2613 = vadd.f32 %v2611, %v2612
  %v2614 = vsel %vm930, %v2149, 0.0
  %v2615 = vadd.f32 %v2613, %v2614
  %v2616 = vsel %vm930, %v2150, 0.0
  %v2617 = vadd.f32 %v2615, %v2616
  %v2618 = vsel %vm930, %v2151, 0.0
  %v2619 = vadd.f32 %v2617, %v2618
  %v2620 = vsel %vm930, %v2152, 0.0
  %v2621 = vadd.f32 %v2619, %v2620
  %v2622 = vsel %vm930, %v2153, 0.0
  %v2623 = vadd.f32 %v2621, %v2622
  %v2624 = vsel %vm930, %v2154, 0.0
  %v2625 = vadd.f32 %v2623, %v2624
  %v2626 = vsel %vm930, %v2155, 0.0
  %v2627 = vadd.f32 %v2625, %v2626
  %v2628 = vrot.slane %v2627, 4
  %v2629 = vadd.f32 %v2627, %v2628
  %v2630 = vrot.slane %v2629, 2
  %v2631 = vadd.f32 %v2629, %v2630
  %v2632 = vrot.slane %v2631, 1
  %v2633 = vadd.f32 %v2631, %v2632
  %v2634 = vsel %vm930, %v2156, 0.0
  %v2635 = vsel %vm930, %v2157, 0.0
  %v2636 = vadd.f32 %v2634, %v2635
  %v2637 = vsel %vm930, %v2158, 0.0
  %v2638 = vadd.f32 %v2636, %v2637
  %v2639 = vsel %vm930, %v2159, 0.0
  %v2640 = vadd.f32 %v2638, %v2639
  %v2641 = vsel %vm930, %v2160, 0.0
  %v2642 = vadd.f32 %v2640, %v2641
  %v2643 = vsel %vm930, %v2161, 0.0
  %v2644 = vadd.f32 %v2642, %v2643
  %v2645 = vsel %vm930, %v2162, 0.0
  %v2646 = vadd.f32 %v2644, %v2645
  %v2647 = vsel %vm930, %v2163, 0.0
  %v2648 = vadd.f32 %v2646, %v2647
  %v2649 = vsel %vm930, %v2164, 0.0
  %v2650 = vadd.f32 %v2648, %v2649
  %v2651 = vsel %vm930, %v2165, 0.0
  %v2652 = vadd.f32 %v2650, %v2651
  %v2653 = vsel %vm930, %v2166, 0.0
  %v2654 = vadd.f32 %v2652, %v2653
  %v2655 = vsel %vm930, %v2167, 0.0
  %v2656 = vadd.f32 %v2654, %v2655
  %v2657 = vsel %vm930, %v2168, 0.0
  %v2658 = vadd.f32 %v2656, %v2657
  %v2659 = vsel %vm930, %v2169, 0.0
  %v2660 = vadd.f32 %v2658, %v2659
  %v2661 = vsel %vm930, %v2170, 0.0
  %v2662 = vadd.f32 %v2660, %v2661
  %v2663 = vsel %vm930, %v2171, 0.0
  %v2664 = vadd.f32 %v2662, %v2663
  %v2665 = vsel %vm930, %v2172, 0.0
  %v2666 = vadd.f32 %v2664, %v2665
  %v2667 = vsel %vm930, %v2173, 0.0
  %v2668 = vadd.f32 %v2666, %v2667
  %v2669 = vsel %vm930, %v2174, 0.0
  %v2670 = vadd.f32 %v2668, %v2669
  %v2671 = vsel %vm930, %v2175, 0.0
  %v2672 = vadd.f32 %v2670, %v2671
  %v2673 = vsel %vm930, %v2176, 0.0
  %v2674 = vadd.f32 %v2672, %v2673
  %v2675 = vsel %vm930, %v2177, 0.0
  %v2676 = vadd.f32 %v2674, %v2675
  %v2677 = vsel %vm930, %v2178, 0.0
  %v2678 = vadd.f32 %v2676, %v2677
  %v2679 = vsel %vm930, %v2179, 0.0
  %v2680 = vadd.f32 %v2678, %v2679
  %v2681 = vsel %vm930, %v2180, 0.0
  %v2682 = vadd.f32 %v2680, %v2681
  %v2683 = vsel %vm930, %v2181, 0.0
  %v2684 = vadd.f32 %v2682, %v2683
  %v2685 = vsel %vm930, %v2182, 0.0
  %v2686 = vadd.f32 %v2684, %v2685
  %v2687 = vsel %vm930, %v2183, 0.0
  %v2688 = vadd.f32 %v2686, %v2687
  %v2689 = vsel %vm930, %v2184, 0.0
  %v2690 = vadd.f32 %v2688, %v2689
  %v2691 = vsel %vm930, %v2185, 0.0
  %v2692 = vadd.f32 %v2690, %v2691
  %v2693 = vsel %vm930, %v2186, 0.0
  %v2694 = vadd.f32 %v2692, %v2693
  %v2695 = vsel %vm930, %v2187, 0.0
  %v2696 = vadd.f32 %v2694, %v2695
  %v2697 = vrot.slane %v2696, 4
  %v2698 = vadd.f32 %v2696, %v2697
  %v2699 = vrot.slane %v2698, 2
  %v2700 = vadd.f32 %v2698, %v2699
  %v2701 = vrot.slane %v2700, 1
  %v2702 = vadd.f32 %v2700, %v2701
  %v2703 = vsel %vm930, %v2188, 0.0
  %v2704 = vsel %vm930, %v2189, 0.0
  %v2705 = vadd.f32 %v2703, %v2704
  %v2706 = vsel %vm930, %v2190, 0.0
  %v2707 = vadd.f32 %v2705, %v2706
  %v2708 = vsel %vm930, %v2191, 0.0
  %v2709 = vadd.f32 %v2707, %v2708
  %v2710 = vsel %vm930, %v2192, 0.0
  %v2711 = vadd.f32 %v2709, %v2710
  %v2712 = vsel %vm930, %v2193, 0.0
  %v2713 = vadd.f32 %v2711, %v2712
  %v2714 = vsel %vm930, %v2194, 0.0
  %v2715 = vadd.f32 %v2713, %v2714
  %v2716 = vsel %vm930, %v2195, 0.0
  %v2717 = vadd.f32 %v2715, %v2716
  %v2718 = vsel %vm930, %v2196, 0.0
  %v2719 = vadd.f32 %v2717, %v2718
  %v2720 = vsel %vm930, %v2197, 0.0
  %v2721 = vadd.f32 %v2719, %v2720
  %v2722 = vsel %vm930, %v2198, 0.0
  %v2723 = vadd.f32 %v2721, %v2722
  %v2724 = vsel %vm930, %v2199, 0.0
  %v2725 = vadd.f32 %v2723, %v2724
  %v2726 = vsel %vm930, %v2200, 0.0
  %v2727 = vadd.f32 %v2725, %v2726
  %v2728 = vsel %vm930, %v2201, 0.0
  %v2729 = vadd.f32 %v2727, %v2728
  %v2730 = vsel %vm930, %v2202, 0.0
  %v2731 = vadd.f32 %v2729, %v2730
  %v2732 = vsel %vm930, %v2203, 0.0
  %v2733 = vadd.f32 %v2731, %v2732
  %v2734 = vsel %vm930, %v2204, 0.0
  %v2735 = vadd.f32 %v2733, %v2734
  %v2736 = vsel %vm930, %v2205, 0.0
  %v2737 = vadd.f32 %v2735, %v2736
  %v2738 = vsel %vm930, %v2206, 0.0
  %v2739 = vadd.f32 %v2737, %v2738
  %v2740 = vsel %vm930, %v2207, 0.0
  %v2741 = vadd.f32 %v2739, %v2740
  %v2742 = vsel %vm930, %v2208, 0.0
  %v2743 = vadd.f32 %v2741, %v2742
  %v2744 = vsel %vm930, %v2209, 0.0
  %v2745 = vadd.f32 %v2743, %v2744
  %v2746 = vsel %vm930, %v2210, 0.0
  %v2747 = vadd.f32 %v2745, %v2746
  %v2748 = vsel %vm930, %v2211, 0.0
  %v2749 = vadd.f32 %v2747, %v2748
  %v2750 = vsel %vm930, %v2212, 0.0
  %v2751 = vadd.f32 %v2749, %v2750
  %v2752 = vsel %vm930, %v2213, 0.0
  %v2753 = vadd.f32 %v2751, %v2752
  %v2754 = vsel %vm930, %v2214, 0.0
  %v2755 = vadd.f32 %v2753, %v2754
  %v2756 = vsel %vm930, %v2215, 0.0
  %v2757 = vadd.f32 %v2755, %v2756
  %v2758 = vsel %vm930, %v2216, 0.0
  %v2759 = vadd.f32 %v2757, %v2758
  %v2760 = vsel %vm930, %v2217, 0.0
  %v2761 = vadd.f32 %v2759, %v2760
  %v2762 = vsel %vm930, %v2218, 0.0
  %v2763 = vadd.f32 %v2761, %v2762
  %v2764 = vsel %vm930, %v2219, 0.0
  %v2765 = vadd.f32 %v2763, %v2764
  %v2766 = vrot.slane %v2765, 4
  %v2767 = vadd.f32 %v2765, %v2766
  %v2768 = vrot.slane %v2767, 2
  %v2769 = vadd.f32 %v2767, %v2768
  %v2770 = vrot.slane %v2769, 1
  %v2771 = vadd.f32 %v2769, %v2770
  %v2772 = vld [vmem:[%s2] sm:$0xff]
  %v2773 = vld [vmem:[%s2 + $0x8] sm:$0xff]
  %v2774 = vld [vmem:[%s2 + $0x10] sm:$0xff]
  %v2775 = vld [vmem:[%s2 + $0x18] sm:$0xff]
  %v2776 = vld [vmem:[%s3] sm:$0x1]
  %v2778 = vperm.slane %v2776, 0
  %vm2788 = vcmask 1041409
  %v2789 = vsel %vm2788, %v2357, %v2288
  %vm2790 = vcmask 1042434
  %v2791 = vsel %vm2790, %v2426, %v2789
  %vm2792 = vcmask 1043459
  %v2793 = vsel %vm2792, %v2495, %v2791
  %vm2794 = vcmask 1044484
  %v2795 = vsel %vm2794, %v2564, %v2793
  %vm2796 = vcmask 1045509
  %v2797 = vsel %vm2796, %v2633, %v2795
  %vm2798 = vcmask 1046534
  %v2799 = vsel %vm2798, %v2702, %v2797
  %vm2800 = vcmask 1047559
  %v2801 = vsel %vm2800, %v2771, %v2799
  %v2802 = vsel %vm930, %v2801, 0
  %2804 = vmatpush.msra.mxu0 0.0
  %2805 = vmatpush.msra.mxu0 0.0
  %2806 = vmatpush.msra.mxu0 0.0
  %2807 = vmatpush.msra.mxu0 0.0
  %2808 = vmatpush.msra.mxu0 0.0
  %2809 = vmatpush.msra.mxu0 0.0
  %2810 = vmatpush.msra.mxu0 0.0
  %2811 = vmatpush.msra.mxu0 0.0
  %2812 = vmatpush.msra.mxu0 0.0
  %2813 = vmatpush.msra.mxu0 0.0
  %2814 = vmatpush.msra.mxu0 0.0
  %2815 = vmatpush.msra.mxu0 0.0
  %2816 = vmatpush.msra.mxu0 %v2775
  %2817 = vmatpush.msra.mxu0 %v2774
  %2818 = vmatpush.msra.mxu0 %v2773
  %2819 = vmatpush.msra.mxu0 %v2772
  %2820 = vmatmul.f32.gmra.mxu0 %v2802
  %v2821 = vpop.f32.mrf.mxu0
  %v2822 = vadd.f32 %v2778, %v2821
  %2823 = vdwg.mxu0
  %2824 = vst [vmem:[%s4] sm:$0xff] %v2822
  // Predicated region
  $region18: #{net_forward.1} parent=0 // pred_check
    _
  $region19: #{net_forward.1} parent=0 // pred_check_branch
    %2826 = sbr.rel (0) target = $region21
  $region20: #{net_forward.1} parent=0 // pred_region
    _
  $region21: #{net_forward.1} parent=0 // pred_fallthru
    _
  // Predicated region
  $region22: #{net_forward.1} parent=0 // pred_check
    _
  $region23: #{net_forward.1} parent=0 // pred_check_branch
    %2828 = sbr.rel (0) target = $region25
  $region24: #{net_forward.1} parent=0 // pred_region
    _
  $region25: #{net_forward.1} parent=0 // pred_fallthru
    _

</llo_original>
